<compile_context>
chip_gen: v5e
topology: v5e:2x2
jax: 0.10.0
libtpu: 0.0.40
codegen_flags: <defaults>
</compile_context>

<pallas_src>
import functools

import numpy as np
import jax
import jax.numpy as jnp
from jax.experimental import pallas as pl
from jax.experimental.pallas import tpu as pltpu


# ----------------------------------------------------------------------------
# Static planning helpers (pure Python, run at trace time)
# ----------------------------------------------------------------------------
def _round_up(a, b):
    return ((a + b - 1) // b) * b


def _phase_plan(K, stride, padding):
    """Per output phase ph (0 <= ph < stride): list of (tap_k, rel_offset).

    The transposed conv restricted to output positions  stride*i + ph  is an
    ordinary stride-1 conv over the *original* input using taps
        k = r + stride*m,    r = (K-1-padding-ph) mod stride,
    reading the input at offset  i + m + off,  off = (ph + r - (K-1-padding))//stride
    (off may be negative; the wrapper zero-pads by that amount)."""
    pad_lo = K - 1 - padding
    plan = []
    for ph in range(stride):
        r = (pad_lo - ph) % stride
        off = (ph + r - pad_lo) // stride          # exact division
        taps = []
        m = 0
        while r + stride * m <= K - 1:
            taps.append((r + stride * m, m + off))
            m += 1
        plan.append(taps)
    return plan


def _vmem_plan():
    """(vmem_limit_bytes, tile_budget_bytes) derived from the actual chip."""
    cap = 64 * 1024 * 1024                          # conservative fallback (v7x)
    try:
        cap = int(getattr(pltpu.get_tpu_info(), "vmem_capacity_bytes", cap))
    except Exception:
        pass
    vmem_limit = min(int(cap * 0.8), 110 * 1024 * 1024)   # leave compiler headroom
    tile_budget = int(cap * 0.4)
    return vmem_limit, tile_budget


def _pick_row_tile(Hc, Wcp, Cin, Cout_pad, S2, n_slabs, max_taps, N,
                   fixed_bytes, budget_bytes):
    """Phase-output rows per grid step, sized against the real VMEM residents."""
    avail = max(budget_bytes - fixed_bytes, 256 * 1024)
    per_row = Wcp * (2 * S2 * Cout_pad * 2          # double-buffered bf16 out block
                     + n_slabs * Cin * 2            # deduped bf16 input slabs
                     + max_taps * Cin * 2           # fused-concat temp (largest phase)
                     + 3 * Cout_pad * 4)            # f32 acc + bias bcast + epilogue
    th = int(max(1, min(Hc, avail // max(per_row, 1))))
    # Expose a few grid steps for pipelining / megacore, but never shrink the
    # matmul M dim (= th * Wcp) below ~512.
    if th >= Hc and N * pl.cdiv(Hc, th) < 4:
        th_alt = int(pl.cdiv(Hc, max(1, pl.cdiv(4, N))))
        if th_alt * Wcp >= 512:
            th = th_alt
    return max(1, min(th, Hc))


# ----------------------------------------------------------------------------
# Pallas kernel
# ----------------------------------------------------------------------------
def _conv_t_bn_relu_kernel(x_ref, w_ref, bias_ref, o_ref, *,
                           phase_specs, th, wcp, cin, fuse):
    # x_ref:    (1, Hx, Wx, Cin)        halo-padded un-dilated image (bf16),
    #                                   resident across row tiles
    # w_ref:    (K*K, Cin, Cout_pad)    flipped, BN-scale-folded weights (bf16),
    #                                   tap axis grouped per phase
    # bias_ref: (1, Cout_pad) f32       fused BN bias = beta - mean*scale
    # o_ref:    (1, S2, th*wcp, Cout_pad)  per-phase output planes (bf16)
    t = pl.program_id(1)
    row_base = pl.multiple_of(t * th, th)
    m = th * wcp
    cout = o_ref.shape[-1]

    # Deduped shifted-window slabs: built lazily, at most once per distinct
    # (row_off, col_off) per grid step, reused by every phase/tap.
    slabs = {}

    def slab(key):
        if key not in slabs:
            ro, co = key
            xs = x_ref[0, pl.ds(row_base + ro, th), pl.ds(co, wcp), :]
            slabs[key] = xs.reshape(m, cin)
        return slabs[key]

    # Hoisted bias broadcast (f32) — shared by every phase epilogue.
    bias = jnp.broadcast_to(bias_ref[...], (m, cout))

    for p, (tap0, keys) in enumerate(phase_specs):          # static phase loop
        ntaps = len(keys)
        if ntaps == 0:                                      # only if K < stride
            acc = jnp.zeros((m, cout), jnp.float32)
        elif fuse and ntaps > 1:
            # One matmul per phase with contraction dim taps*Cin (lane-aligned).
            xcat = jnp.concatenate([slab(k) for k in keys], axis=-1)
            wcat = w_ref[tap0:tap0 + ntaps].reshape(ntaps * cin, cout)
            acc = jnp.dot(xcat, wcat, preferred_element_type=jnp.float32)
        else:
            # Per-tap dots, accumulated in registers (no VMEM scratch).
            acc = jnp.dot(slab(keys[0]), w_ref[tap0],
                          preferred_element_type=jnp.float32)
            for i in range(1, ntaps):
                acc = acc + jnp.dot(slab(keys[i]), w_ref[tap0 + i],
                                    preferred_element_type=jnp.float32)
        # fused eval-BN (scale already folded into weights) + ReLU, bf16 store
        o_ref[0, p] = jnp.maximum(acc + bias, 0.0).astype(o_ref.dtype)


# ----------------------------------------------------------------------------
# Wrapper (layout, halo pad, weight/BN folding, phase interleave)
# ----------------------------------------------------------------------------
def conv2d_transpose_bn_relu(x_nchw, w_pt, gamma, beta, run_mean, run_var, *,
                             stride, padding, output_padding, eps=1e-5,
                             row_tile=None):
    """Equivalent of Conv2dTranspose.forward (eval-mode BN). x_nchw: (N,Cin,H,W)."""
    N, Cin, H, W = map(int, x_nchw.shape)
    Cin_w, Cout, K, Kw = map(int, w_pt.shape)
    assert Cin == Cin_w and K == Kw
    assert 0 <= padding <= K - 1, "padding > kernel_size-1 not supported"
    s = int(stride)
    assert 0 <= output_padding < max(s, 1)
    S2 = s * s

    Ho = (H - 1) * s - 2 * padding + K + output_padding
    Wo = (W - 1) * s - 2 * padding + K + output_padding
    Hc = int(pl.cdiv(Ho, s))                     # phase-output rows needed
    Wc = int(pl.cdiv(Wo, s))                     # phase-output cols needed
    Wcp = _round_up(Wc, 16)                      # clean bf16 tile collapse + store
    Cout_pad = _round_up(Cout, 128)              # lane-dense, unmasked stores

    # --- static sub-pixel tap plan -------------------------------------------
    row_plan = _phase_plan(K, s, padding)
    col_plan = _phase_plan(K, s, padding)
    rel_rows = [r for taps in row_plan for (_, r) in taps] or [0]
    rel_cols = [c for taps in col_plan for (_, c) in taps] or [0]
    Lh, Lw = max(0, -min(rel_rows)), max(0, -min(rel_cols))
    max_rr, max_cc = max(rel_rows), max(rel_cols)

    # Taps grouped per (ph, pw) phase; the weight slab uses the same ordering.
    order, phase_specs, slab_keys = [], [], set()
    for ph in range(s):
        for pw in range(s):
            tap0, keys = len(order), []
            for (kh, rr) in row_plan[ph]:
                for (kw, cc) in col_plan[pw]:
                    order.append((kh, kw))
                    keys.append((rr + Lh, cc + Lw))
                    slab_keys.add((rr + Lh, cc + Lw))
            phase_specs.append((tap0, tuple(keys)))
    phase_specs = tuple(phase_specs)
    n_slabs = max(1, len(slab_keys))
    max_taps = max(1, max(len(k) for _, k in phase_specs))

    # Fuse a phase's taps into one matmul only when the channel concat is
    # lane-aligned; otherwise per-tap register accumulation is cheaper.
    fuse = (Cin % 128 == 0)

    # --- row-tile choice (VMEM-budget aware) ---------------------------------
    vmem_limit, tile_budget = _vmem_plan()
    Hx0 = max(Hc + max_rr, H) + Lh
    Wx0 = max(Wcp + max_cc, W) + Lw
    fixed_bytes = (2 * Hx0 * Wx0 * Cin * 2               # double-buffered image
                   + 2 * K * K * Cin * Cout_pad * 2      # double-buffered weights
                   + 2 * Cout_pad * 4)                   # bias
    if row_tile is not None:
        th = max(1, min(int(row_tile), Hc))
    else:
        th = _pick_row_tile(Hc, Wcp, Cin, Cout_pad, S2, n_slabs, max_taps, N,
                            fixed_bytes, tile_budget)
    n_row_tiles = int(pl.cdiv(Hc, th))
    Hc_pad = n_row_tiles * th

    # Halo-padded, un-dilated input extents (all kernel reads stay in bounds).
    Hx = max(Hc_pad + max_rr, H) + Lh
    Wx = max(Wcp + max_cc, W) + Lw

    # --- glue: layout change, halo pad, weight flip + BN folding -------------
    x = jnp.transpose(x_nchw, (0, 2, 3, 1)).astype(jnp.bfloat16)    # NCHW->NHWC
    x_ext = jnp.pad(x, ((0, 0), (Lh, Hx - Lh - H), (Lw, Wx - Lw - W), (0, 0)))

    inv = (gamma / jnp.sqrt(run_var + eps)).astype(jnp.float32)     # (Cout,)
    bias = (beta - run_mean * inv).astype(jnp.float32)
    bias_p = jnp.pad(bias, (0, Cout_pad - Cout)).reshape(1, Cout_pad)

    # PyTorch ConvTranspose2d weight (Cin,Cout,K,K) -> flipped conv (K,K,Cin,Cout),
    # BN scale folded per output channel, Cout padded, taps re-ordered per phase.
    w_flip = jnp.transpose(w_pt[:, :, ::-1, ::-1], (2, 3, 0, 1)).astype(jnp.float32)
    w_sc = w_flip * inv
    w_sc = jnp.pad(w_sc, ((0, 0), (0, 0), (0, 0), (0, Cout_pad - Cout)))
    w_grp = jnp.stack([w_sc[kh, kw] for (kh, kw) in order],
                      axis=0).astype(jnp.bfloat16)                  # (K*K,Cin,Coutp)

    kernel = functools.partial(_conv_t_bn_relu_kernel,
                               phase_specs=phase_specs, th=th, wcp=Wcp,
                               cin=Cin, fuse=fuse)

    flops = 2 * N * Hc_pad * Wcp * K * K * Cin * Cout_pad
    bytes_accessed = (x_ext.size * 2 + w_grp.size * 2 + bias_p.size * 4
                      + N * S2 * Hc_pad * Wcp * Cout_pad * 2)

    out_phases = pl.pallas_call(
        kernel,
        out_shape=jax.ShapeDtypeStruct((N, S2, Hc_pad * Wcp, Cout_pad),
                                       jnp.bfloat16),
        grid_spec=pltpu.PrefetchScalarGridSpec(
            num_scalar_prefetch=0,
            grid=(N, n_row_tiles),
            in_specs=[
                # Full (small, un-dilated) image per batch element; the block
                # index is constant in the row-tile axis so it stays resident
                # in VMEM while the row tiles sweep.
                pl.BlockSpec((1, Hx, Wx, Cin), lambda n, t: (n, 0, 0, 0)),
                pl.BlockSpec((K * K, Cin, Cout_pad), lambda n, t: (0, 0, 0)),
                pl.BlockSpec((1, Cout_pad), lambda n, t: (0, 0)),
            ],
            out_specs=pl.BlockSpec((1, S2, th * Wcp, Cout_pad),
                                   lambda n, t: (n, 0, t, 0)),
        ),
        compiler_params=pltpu.CompilerParams(
            dimension_semantics=("parallel", "parallel"),
            vmem_limit_bytes=vmem_limit),
        cost_estimate=pl.CostEstimate(flops=flops, transcendentals=0,
                                      bytes_accessed=bytes_accessed),
    )(x_ext, w_grp, bias_p)

    # Interleave phases -> NHWC, crop the row/col/channel pads, -> NCHW.
    # This fuses into the single XLA copy the NHWC->NCHW transpose required anyway.
    out = out_phases.reshape(N, s, s, Hc_pad, Wcp, Cout_pad)
    out = jnp.transpose(out, (0, 3, 1, 4, 2, 5)).reshape(
        N, Hc_pad * s, Wcp * s, Cout_pad)[:, :Ho, :Wo, :Cout]
    return jnp.transpose(out, (0, 3, 1, 2)).astype(x_nchw.dtype)


# ----------------------------------------------------------------------------
# Pure-JAX reference (f32) for validation
# ----------------------------------------------------------------------------
def _reference(x_nchw, w_pt, gamma, beta, run_mean, run_var,
               *, stride, padding, output_padding, eps=1e-5):
    K = w_pt.shape[2]
    w_flip = jnp.transpose(w_pt[:, :, ::-1, ::-1], (2, 3, 0, 1))   # HWIO
    pad_lo = K - 1 - padding
    pad_hi = K - 1 - padding + output_padding
    x_nhwc = jnp.transpose(x_nchw, (0, 2, 3, 1))
    y = jax.lax.conv_general_dilated(
        x_nhwc, w_flip,
        window_strides=(1, 1),
        padding=((pad_lo, pad_hi), (pad_lo, pad_hi)),
        lhs_dilation=(stride, stride),
        dimension_numbers=("NHWC", "HWIO", "NHWC"),
    )
    y = (y - run_mean) / jnp.sqrt(run_var + eps) * gamma + beta
    y = jnp.maximum(y, 0.0)
    return jnp.transpose(y, (0, 3, 1, 2))


def _run_case(key, *, N, Cin, Cout, H, W, K, stride, padding, output_padding,
              row_tile=None, rtol=2e-2, atol=3e-2):
    k_x, k_w, k_g, k_b, k_m, k_v = jax.random.split(key, 6)
    x = jax.random.normal(k_x, (N, Cin, H, W), jnp.float32)
    w_pt = jax.random.normal(k_w, (Cin, Cout, K, K), jnp.float32) * 0.1
    gamma = jax.random.normal(k_g, (Cout,), jnp.float32) * 0.1 + 1.0
    beta = jax.random.normal(k_b, (Cout,), jnp.float32) * 0.1
    run_mean = jax.random.normal(k_m, (Cout,), jnp.float32) * 0.1
    run_var = jnp.abs(jax.random.normal(k_v, (Cout,), jnp.float32)) * 0.1 + 0.9

    out = conv2d_transpose_bn_relu(
        x, w_pt, gamma, beta, run_mean, run_var,
        stride=stride, padding=padding, output_padding=output_padding,
        row_tile=row_tile)
    out = jax.block_until_ready(out)

    ref = _reference(x, w_pt, gamma, beta, run_mean, run_var,
                     stride=stride, padding=padding,
                     output_padding=output_padding)

    Ho = (H - 1) * stride - 2 * padding + K + output_padding
    Wo = (W - 1) * stride - 2 * padding + K + output_padding
    assert out.shape == (N, Cout, Ho, Wo), out.shape
    # bf16 MXU operands / bf16 output (f32 accumulation) -> loosened tolerance.
    np.testing.assert_allclose(np.asarray(out), np.asarray(ref),
                               rtol=rtol, atol=atol)


if __name__ == "__main__":
    key = jax.random.PRNGKey(0)
    k1, k2, k3 = jax.random.split(key, 3)

    # wav2lip-style decoder block at small shapes.
    _run_case(k1, N=2, Cin=4, Cout=8, H=16, W=16, K=3, stride=2, padding=1,
              output_padding=1)
    # Even kernel, forced multi-row-tile path, non-multiple-of-8 phase width.
    _run_case(k2, N=1, Cin=8, Cout=16, H=12, W=12, K=4, stride=2, padding=1,
              output_padding=0, row_tile=5)
    # Lane-aligned Cin -> exercises the fused per-phase (taps*Cin) matmul path.
    _run_case(k3, N=1, Cin=128, Cout=32, H=8, W=8, K=3, stride=2, padding=1,
              output_padding=1)

    print("KERNEL_OK")
</pallas_src>

<mosaic_0001>
module attributes {stable_mosaic.version = 11 : i64} {
  func.func @_conv_t_bn_relu_kernel(%arg0: i32, %arg1: i32, %arg2: memref<1x17x17x4xbf16, #tpu.memory_space<vmem>>, %arg3: memref<9x4x128xbf16, #tpu.memory_space<vmem>>, %arg4: memref<1x128xf32, #tpu.memory_space<vmem>>, %arg5: memref<1x4x256x128xbf16, #tpu.memory_space<vmem>>) attributes {dimension_semantics = [#tpu.dimension_semantics<parallel>, #tpu.dimension_semantics<parallel>], iteration_bounds = array<i64: 2, 1>, scalar_prefetch = 0 : i64, scratch_operands = 0 : i64, tpu.core_type = #tpu.core_type<tc>, window_params = [{transform_indices = @transform_0, window_bounds = array<i64: 1, 17, 17, 4>}, {pipeline_mode = #tpu.pipeline_mode<synchronous>, transform_indices = @transform_1, window_bounds = array<i64: 9, 4, 128>}, {pipeline_mode = #tpu.pipeline_mode<synchronous>, transform_indices = @transform_2, window_bounds = array<i64: 1, 128>}, {transform_indices = @transform_3, window_bounds = array<i64: 1, 4, 256, 128>}]} {
    %c16_i32 = arith.constant 16 : i32
    %0 = arith.muli %arg1, %c16_i32 : i32
    %1 = tpu.assume_multiple %0, 16 : i32
    %c0 = arith.constant 0 : index
    %c0_0 = arith.constant 0 : index
    %2 = vector.load %arg4[%c0, %c0_0] : memref<1x128xf32, #tpu.memory_space<vmem>>, vector<1x128xf32>
    %3 = vector.shape_cast %2 : vector<1x128xf32> to vector<1x128xf32>
    %4 = vector.broadcast %3 : vector<1x128xf32> to vector<256x128xf32>
    %c0_i32 = arith.constant 0 : i32
    %5 = arith.addi %1, %c0_i32 : i32
    %c0_1 = arith.constant 0 : index
    %6 = arith.index_cast %5 : i32 to index
    %c0_2 = arith.constant 0 : index
    %c0_3 = arith.constant 0 : index
    %7 = vector.load %arg2[%c0_1, %6, %c0_2, %c0_3] : memref<1x17x17x4xbf16, #tpu.memory_space<vmem>>, vector<1x16x16x4xbf16>
    %8 = vector.shape_cast %7 : vector<1x16x16x4xbf16> to vector<16x16x4xbf16>
    %9 = vector.shape_cast %8 : vector<16x16x4xbf16> to vector<256x4xbf16>
    %c0_4 = arith.constant 0 : index
    %c0_5 = arith.constant 0 : index
    %c0_6 = arith.constant 0 : index
    %10 = vector.load %arg3[%c0_4, %c0_5, %c0_6] : memref<9x4x128xbf16, #tpu.memory_space<vmem>>, vector<1x4x128xbf16>
    %11 = vector.shape_cast %10 : vector<1x4x128xbf16> to vector<4x128xbf16>
    %cst = arith.constant dense<0.000000e+00> : vector<256x128xf32>
    %12 = tpu.matmul %9, %11, %cst {dimension_numbers = #tpu.dot_dimension_numbers<[1], [0], [0], [1], [0, 0, 1, 1], [], []>} : vector<256x4xbf16>, vector<4x128xbf16>, vector<256x128xf32> -> vector<256x128xf32>
    %13 = arith.addf %12, %4 : vector<256x128xf32>
    %cst_7 = arith.constant 0.000000e+00 : f32
    %14 = vector.broadcast %cst_7 : f32 to vector<256x128xf32>
    %15 = arith.maximumf %13, %14 : vector<256x128xf32>
    %16 = arith.truncf %15 : vector<256x128xf32> to vector<256x128xbf16>
    %c0_8 = arith.constant 0 : index
    %c0_9 = arith.constant 0 : index
    %c0_10 = arith.constant 0 : index
    %c0_11 = arith.constant 0 : index
    %17 = vector.load %arg5[%c0_8, %c0_9, %c0_10, %c0_11] : memref<1x4x256x128xbf16, #tpu.memory_space<vmem>>, vector<1x1x256x128xbf16>
    %18 = vector.shape_cast %17 : vector<1x1x256x128xbf16> to vector<256x128xbf16>
    %19 = vector.shape_cast %16 : vector<256x128xbf16> to vector<1x1x256x128xbf16>
    tpu.vector_store %arg5[%c0_8, %c0_9, %c0_10, %c0_11], %19 {strides = array<i32>} : memref<1x4x256x128xbf16, #tpu.memory_space<vmem>>, vector<1x1x256x128xbf16>,
    %c1 = arith.constant 1 : index
    %c0_12 = arith.constant 0 : index
    %c0_13 = arith.constant 0 : index
    %20 = vector.load %arg3[%c1, %c0_12, %c0_13] : memref<9x4x128xbf16, #tpu.memory_space<vmem>>, vector<1x4x128xbf16>
    %21 = vector.shape_cast %20 : vector<1x4x128xbf16> to vector<4x128xbf16>
    %cst_14 = arith.constant dense<0.000000e+00> : vector<256x128xf32>
    %22 = tpu.matmul %9, %21, %cst_14 {dimension_numbers = #tpu.dot_dimension_numbers<[1], [0], [0], [1], [0, 0, 1, 1], [], []>} : vector<256x4xbf16>, vector<4x128xbf16>, vector<256x128xf32> -> vector<256x128xf32>
    %c0_i32_15 = arith.constant 0 : i32
    %23 = arith.addi %1, %c0_i32_15 : i32
    %c0_16 = arith.constant 0 : index
    %24 = arith.index_cast %23 : i32 to index
    %c1_17 = arith.constant 1 : index
    %c0_18 = arith.constant 0 : index
    %25 = vector.load %arg2[%c0_16, %24, %c1_17, %c0_18] : memref<1x17x17x4xbf16, #tpu.memory_space<vmem>>, vector<1x16x16x4xbf16>
    %26 = vector.shape_cast %25 : vector<1x16x16x4xbf16> to vector<16x16x4xbf16>
    %27 = vector.shape_cast %26 : vector<16x16x4xbf16> to vector<256x4xbf16>
    %c2 = arith.constant 2 : index
    %c0_19 = arith.constant 0 : index
    %c0_20 = arith.constant 0 : index
    %28 = vector.load %arg3[%c2, %c0_19, %c0_20] : memref<9x4x128xbf16, #tpu.memory_space<vmem>>, vector<1x4x128xbf16>
    %29 = vector.shape_cast %28 : vector<1x4x128xbf16> to vector<4x128xbf16>
    %cst_21 = arith.constant dense<0.000000e+00> : vector<256x128xf32>
    %30 = tpu.matmul %27, %29, %cst_21 {dimension_numbers = #tpu.dot_dimension_numbers<[1], [0], [0], [1], [0, 0, 1, 1], [], []>} : vector<256x4xbf16>, vector<4x128xbf16>, vector<256x128xf32> -> vector<256x128xf32>
    %31 = arith.addf %22, %30 : vector<256x128xf32>
    %32 = arith.addf %31, %4 : vector<256x128xf32>
    %cst_22 = arith.constant 0.000000e+00 : f32
    %33 = vector.broadcast %cst_22 : f32 to vector<256x128xf32>
    %34 = arith.maximumf %32, %33 : vector<256x128xf32>
    %35 = arith.truncf %34 : vector<256x128xf32> to vector<256x128xbf16>
    %c0_23 = arith.constant 0 : index
    %c1_24 = arith.constant 1 : index
    %c0_25 = arith.constant 0 : index
    %c0_26 = arith.constant 0 : index
    %36 = vector.load %arg5[%c0_23, %c1_24, %c0_25, %c0_26] : memref<1x4x256x128xbf16, #tpu.memory_space<vmem>>, vector<1x1x256x128xbf16>
    %37 = vector.shape_cast %36 : vector<1x1x256x128xbf16> to vector<256x128xbf16>
    %38 = vector.shape_cast %35 : vector<256x128xbf16> to vector<1x1x256x128xbf16>
    tpu.vector_store %arg5[%c0_23, %c1_24, %c0_25, %c0_26], %38 {strides = array<i32>} : memref<1x4x256x128xbf16, #tpu.memory_space<vmem>>, vector<1x1x256x128xbf16>,
    %c3 = arith.constant 3 : index
    %c0_27 = arith.constant 0 : index
    %c0_28 = arith.constant 0 : index
    %39 = vector.load %arg3[%c3, %c0_27, %c0_28] : memref<9x4x128xbf16, #tpu.memory_space<vmem>>, vector<1x4x128xbf16>
    %40 = vector.shape_cast %39 : vector<1x4x128xbf16> to vector<4x128xbf16>
    %cst_29 = arith.constant dense<0.000000e+00> : vector<256x128xf32>
    %41 = tpu.matmul %9, %40, %cst_29 {dimension_numbers = #tpu.dot_dimension_numbers<[1], [0], [0], [1], [0, 0, 1, 1], [], []>} : vector<256x4xbf16>, vector<4x128xbf16>, vector<256x128xf32> -> vector<256x128xf32>
    %c1_i32 = arith.constant 1 : i32
    %42 = arith.addi %1, %c1_i32 : i32
    %c0_30 = arith.constant 0 : index
    %43 = arith.index_cast %42 : i32 to index
    %c0_31 = arith.constant 0 : index
    %c0_32 = arith.constant 0 : index
    %44 = vector.load %arg2[%c0_30, %43, %c0_31, %c0_32] : memref<1x17x17x4xbf16, #tpu.memory_space<vmem>>, vector<1x16x16x4xbf16>
    %45 = vector.shape_cast %44 : vector<1x16x16x4xbf16> to vector<16x16x4xbf16>
    %46 = vector.shape_cast %45 : vector<16x16x4xbf16> to vector<256x4xbf16>
    %c4 = arith.constant 4 : index
    %c0_33 = arith.constant 0 : index
    %c0_34 = arith.constant 0 : index
    %47 = vector.load %arg3[%c4, %c0_33, %c0_34] : memref<9x4x128xbf16, #tpu.memory_space<vmem>>, vector<1x4x128xbf16>
    %48 = vector.shape_cast %47 : vector<1x4x128xbf16> to vector<4x128xbf16>
    %cst_35 = arith.constant dense<0.000000e+00> : vector<256x128xf32>
    %49 = tpu.matmul %46, %48, %cst_35 {dimension_numbers = #tpu.dot_dimension_numbers<[1], [0], [0], [1], [0, 0, 1, 1], [], []>} : vector<256x4xbf16>, vector<4x128xbf16>, vector<256x128xf32> -> vector<256x128xf32>
    %50 = arith.addf %41, %49 : vector<256x128xf32>
    %51 = arith.addf %50, %4 : vector<256x128xf32>
    %cst_36 = arith.constant 0.000000e+00 : f32
    %52 = vector.broadcast %cst_36 : f32 to vector<256x128xf32>
    %53 = arith.maximumf %51, %52 : vector<256x128xf32>
    %54 = arith.truncf %53 : vector<256x128xf32> to vector<256x128xbf16>
    %c0_37 = arith.constant 0 : index
    %c2_38 = arith.constant 2 : index
    %c0_39 = arith.constant 0 : index
    %c0_40 = arith.constant 0 : index
    %55 = vector.load %arg5[%c0_37, %c2_38, %c0_39, %c0_40] : memref<1x4x256x128xbf16, #tpu.memory_space<vmem>>, vector<1x1x256x128xbf16>
    %56 = vector.shape_cast %55 : vector<1x1x256x128xbf16> to vector<256x128xbf16>
    %57 = vector.shape_cast %54 : vector<256x128xbf16> to vector<1x1x256x128xbf16>
    tpu.vector_store %arg5[%c0_37, %c2_38, %c0_39, %c0_40], %57 {strides = array<i32>} : memref<1x4x256x128xbf16, #tpu.memory_space<vmem>>, vector<1x1x256x128xbf16>,
    %c5 = arith.constant 5 : index
    %c0_41 = arith.constant 0 : index
    %c0_42 = arith.constant 0 : index
    %58 = vector.load %arg3[%c5, %c0_41, %c0_42] : memref<9x4x128xbf16, #tpu.memory_space<vmem>>, vector<1x4x128xbf16>
    %59 = vector.shape_cast %58 : vector<1x4x128xbf16> to vector<4x128xbf16>
    %cst_43 = arith.constant dense<0.000000e+00> : vector<256x128xf32>
    %60 = tpu.matmul %9, %59, %cst_43 {dimension_numbers = #tpu.dot_dimension_numbers<[1], [0], [0], [1], [0, 0, 1, 1], [], []>} : vector<256x4xbf16>, vector<4x128xbf16>, vector<256x128xf32> -> vector<256x128xf32>
    %c6 = arith.constant 6 : index
    %c0_44 = arith.constant 0 : index
    %c0_45 = arith.constant 0 : index
    %61 = vector.load %arg3[%c6, %c0_44, %c0_45] : memref<9x4x128xbf16, #tpu.memory_space<vmem>>, vector<1x4x128xbf16>
    %62 = vector.shape_cast %61 : vector<1x4x128xbf16> to vector<4x128xbf16>
    %cst_46 = arith.constant dense<0.000000e+00> : vector<256x128xf32>
    %63 = tpu.matmul %27, %62, %cst_46 {dimension_numbers = #tpu.dot_dimension_numbers<[1], [0], [0], [1], [0, 0, 1, 1], [], []>} : vector<256x4xbf16>, vector<4x128xbf16>, vector<256x128xf32> -> vector<256x128xf32>
    %64 = arith.addf %60, %63 : vector<256x128xf32>
    %c7 = arith.constant 7 : index
    %c0_47 = arith.constant 0 : index
    %c0_48 = arith.constant 0 : index
    %65 = vector.load %arg3[%c7, %c0_47, %c0_48] : memref<9x4x128xbf16, #tpu.memory_space<vmem>>, vector<1x4x128xbf16>
    %66 = vector.shape_cast %65 : vector<1x4x128xbf16> to vector<4x128xbf16>
    %cst_49 = arith.constant dense<0.000000e+00> : vector<256x128xf32>
    %67 = tpu.matmul %46, %66, %cst_49 {dimension_numbers = #tpu.dot_dimension_numbers<[1], [0], [0], [1], [0, 0, 1, 1], [], []>} : vector<256x4xbf16>, vector<4x128xbf16>, vector<256x128xf32> -> vector<256x128xf32>
    %68 = arith.addf %64, %67 : vector<256x128xf32>
    %c1_i32_50 = arith.constant 1 : i32
    %69 = arith.addi %1, %c1_i32_50 : i32
    %c0_51 = arith.constant 0 : index
    %70 = arith.index_cast %69 : i32 to index
    %c1_52 = arith.constant 1 : index
    %c0_53 = arith.constant 0 : index
    %71 = vector.load %arg2[%c0_51, %70, %c1_52, %c0_53] : memref<1x17x17x4xbf16, #tpu.memory_space<vmem>>, vector<1x16x16x4xbf16>
    %72 = vector.shape_cast %71 : vector<1x16x16x4xbf16> to vector<16x16x4xbf16>
    %73 = vector.shape_cast %72 : vector<16x16x4xbf16> to vector<256x4xbf16>
    %c8 = arith.constant 8 : index
    %c0_54 = arith.constant 0 : index
    %c0_55 = arith.constant 0 : index
    %74 = vector.load %arg3[%c8, %c0_54, %c0_55] : memref<9x4x128xbf16, #tpu.memory_space<vmem>>, vector<1x4x128xbf16>
    %75 = vector.shape_cast %74 : vector<1x4x128xbf16> to vector<4x128xbf16>
    %cst_56 = arith.constant dense<0.000000e+00> : vector<256x128xf32>
    %76 = tpu.matmul %73, %75, %cst_56 {dimension_numbers = #tpu.dot_dimension_numbers<[1], [0], [0], [1], [0, 0, 1, 1], [], []>} : vector<256x4xbf16>, vector<4x128xbf16>, vector<256x128xf32> -> vector<256x128xf32>
    %77 = arith.addf %68, %76 : vector<256x128xf32>
    %78 = arith.addf %77, %4 : vector<256x128xf32>
    %cst_57 = arith.constant 0.000000e+00 : f32
    %79 = vector.broadcast %cst_57 : f32 to vector<256x128xf32>
    %80 = arith.maximumf %78, %79 : vector<256x128xf32>
    %81 = arith.truncf %80 : vector<256x128xf32> to vector<256x128xbf16>
    %c0_58 = arith.constant 0 : index
    %c3_59 = arith.constant 3 : index
    %c0_60 = arith.constant 0 : index
    %c0_61 = arith.constant 0 : index
    %82 = vector.load %arg5[%c0_58, %c3_59, %c0_60, %c0_61] : memref<1x4x256x128xbf16, #tpu.memory_space<vmem>>, vector<1x1x256x128xbf16>
    %83 = vector.shape_cast %82 : vector<1x1x256x128xbf16> to vector<256x128xbf16>
    %84 = vector.shape_cast %81 : vector<256x128xbf16> to vector<1x1x256x128xbf16>
    tpu.vector_store %arg5[%c0_58, %c3_59, %c0_60, %c0_61], %84 {strides = array<i32>} : memref<1x4x256x128xbf16, #tpu.memory_space<vmem>>, vector<1x1x256x128xbf16>,
    return
  }
  func.func @transform_0(%arg0: i32, %arg1: i32) -> (i32, i32, i32, i32) {
    %c0_i32 = arith.constant 0 : i32
    %c0_i32_0 = arith.constant 0 : i32
    %c0_i32_1 = arith.constant 0 : i32
    %c0_i32_2 = arith.constant 0 : i32
    return %arg0, %c0_i32, %c0_i32_0, %c0_i32_1 : i32, i32, i32, i32
  }
  func.func @transform_1(%arg0: i32, %arg1: i32) -> (i32, i32, i32) {
    %c0_i32 = arith.constant 0 : i32
    %c0_i32_0 = arith.constant 0 : i32
    %c0_i32_1 = arith.constant 0 : i32
    %c0_i32_2 = arith.constant 0 : i32
    return %c0_i32, %c0_i32_0, %c0_i32_1 : i32, i32, i32
  }
  func.func @transform_2(%arg0: i32, %arg1: i32) -> (i32, i32) {
    %c0_i32 = arith.constant 0 : i32
    %c0_i32_0 = arith.constant 0 : i32
    %c0_i32_1 = arith.constant 0 : i32
    return %c0_i32, %c0_i32_0 : i32, i32
  }
  func.func @transform_3(%arg0: i32, %arg1: i32) -> (i32, i32, i32, i32) {
    %c0_i32 = arith.constant 0 : i32
    %c0_i32_0 = arith.constant 0 : i32
    %c0_i32_1 = arith.constant 0 : i32
    return %arg0, %c0_i32, %arg1, %c0_i32_0 : i32, i32, i32, i32
  }
}

</mosaic_0001>

<llo_original>
// kernel: tpu_custom_call.1
$region0: #{tpu_custom_call.1}
  #allocation0 [shape = 'u32[]', space=smem, size = 0x4, offset = 0x4, fixed_abs, tag = 'smem constant byte address 0x4 - core index']
  #allocation1 [shape = 'u32[72,128]{1,0:T(1,128)}', space=vmem, size = 0x9000, scoped, tag = 'internal scratch']
  %s0 = inlined_call_operand.vmem [shape: bf16[2,17,17,4], index: 0, kind: input, shape index: {}]
  %s1 = inlined_call_operand.vmem [shape: bf16[9,4,128], index: 1, kind: input, shape index: {}]
  %s2 = inlined_call_operand.vmem [shape: f32[1,128], index: 2, kind: input, shape index: {}]
  %s3 = inlined_call_operand.hbm [shape: bf16[2,4,256,128], index: 3, kind: output, shape index: {}]
  %s4 = sld [smem:[#allocation0]]
  $region45: #{tpu_custom_call.1} parent=0
    _
  %s6 = ssub.s32 1, %s4
  %s7 = scalar_select 0, %s6, %s4
  $region1: #{tpu_custom_call.1} parent=0
    #allocation2 [shape = 'u8[524288]{0}', space=vmem, size = 0x80000, scoped, tag = 'output window, operand 0']
    #allocation3 [shape = 's32[2]{0}', space=sflag, size = 0x8, scoped, tag = 'scoped memory for tpu_custom_call.1']
    %8 = vsyncpa [#allocation3], 0
    %s9 = scalar_lea.sflag [#allocation3], 1
    %10 = vsyncpa %s9, 0
    loop: start=0, step=1, limit=4
    $region2: #{tpu_custom_call.1} parent=1 // loop_pre_header
      _
    $region3: #{tpu_custom_call.1} parent=1 // loop_header
      %s12 = sphi 0, %s16
      %p13 = scmp.ge.s32.totalorder %s12, 4
      %s19 = sphi 0, %s31
      %s20 = sphi 0, %s27
      %s21 = sphi 0, %s19
      %s22 = sphi 0, %s20
      %s23 = sphi 0, %s21
      %s24 = sphi 0, %s22
      %s34 = sphi 0, %s36
      %s37 = sphi 0, %s34
      %s38 = sphi 0, %s37
      %s54 = sphi 0, %s38
      %s58 = sphi 0, %s58
      %s60 = sphi 0, %s58
      %s61 = sphi 0, %s60
      %s75 = sphi 0, %s61
      %s79 = sphi 0, %s79
      %s81 = sphi 0, %s79
      %s82 = sphi 0, %s81
      %s96 = sphi 0, %s82
      %s104 = sphi 0, %s106
      %s107 = sphi 0, %s104
      %s108 = sphi 0, %s107
      %s124 = sphi 0, %s108
    $region4: #{tpu_custom_call.1} parent=1 // loop_header_branch
      %15 = sbr.rel (%p13) target = $region8
    $region5: #{tpu_custom_call.1} parent=1 // loop_body
      %s17 = ssub.s32 %s12, 1
      %s18 = ssub.s32 %s12, 2
      %s25 = sadd.s32 1, %s20
      %p26 = scmp.ge.s32.totalorder %s25, 1
      %s27 = scalar_select %p26, 0, %s25
      %s28 = sadd.s32 1, %s19
      %s29 = scalar_select %p26, %s28, %s19
      %p30 = scmp.ge.s32.totalorder %s29, 2
      %s31 = scalar_select %p30, 0, %s29
      %s32 = ssub.s32 %s19, %s31
      %p33 = scmp.eq.s32.totalorder %s32, 0
      %s35 = sadd.s32 %s34, 1
      %s36 = scalar_select %p33, %s34, %s35
      %p39 = pneg %p33
      %p40 = scmp.eq.s32.totalorder %s12, 1
      %p41 = por %p39, %p40
      %p42 = scmp.ne.s32.totalorder %s34, %s37
      %p43 = scmp.eq.s32.totalorder %s12, 0
      %p44 = por %p42, %p43
      %p45 = scmp.ne.s32.totalorder %s34, %s37
      %p46 = scmp.eq.s32.totalorder %s17, 1
      %p47 = por %p45, %p46
      %p48 = scmp.ne.s32.totalorder %s37, %s38
      %p49 = scmp.eq.s32.totalorder %s17, 0
      %p50 = por %p48, %p49
      %p51 = scmp.ne.s32.totalorder %s37, %s38
      %p52 = scmp.eq.s32.totalorder %s18, 1
      %p53 = por %p51, %p52
      %p55 = scmp.ne.s32.totalorder %s38, %s54
      %p56 = scmp.eq.s32.totalorder %s18, 0
      %p57 = por %p55, %p56
      %s59 = sadd.s32 %s58, 1
      %p62 = scmp.eq.s32.totalorder %s12, 1
      %p63 = scmp.ne.s32.totalorder %s58, %s60
      %p64 = scmp.eq.s32.totalorder %s12, 0
      %p65 = por %p63, %p64
      %p66 = scmp.ne.s32.totalorder %s58, %s60
      %p67 = scmp.eq.s32.totalorder %s17, 1
      %p68 = por %p66, %p67
      %p69 = scmp.ne.s32.totalorder %s60, %s61
      %p70 = scmp.eq.s32.totalorder %s17, 0
      %p71 = por %p69, %p70
      %p72 = scmp.ne.s32.totalorder %s60, %s61
      %p73 = scmp.eq.s32.totalorder %s18, 1
      %p74 = por %p72, %p73
      %p76 = scmp.ne.s32.totalorder %s61, %s75
      %p77 = scmp.eq.s32.totalorder %s18, 0
      %p78 = por %p76, %p77
      %s80 = sadd.s32 %s79, 1
      %p83 = scmp.eq.s32.totalorder %s12, 1
      %p84 = scmp.ne.s32.totalorder %s79, %s81
      %p85 = scmp.eq.s32.totalorder %s12, 0
      %p86 = por %p84, %p85
      %p87 = scmp.ne.s32.totalorder %s79, %s81
      %p88 = scmp.eq.s32.totalorder %s17, 1
      %p89 = por %p87, %p88
      %p90 = scmp.ne.s32.totalorder %s81, %s82
      %p91 = scmp.eq.s32.totalorder %s17, 0
      %p92 = por %p90, %p91
      %p93 = scmp.ne.s32.totalorder %s81, %s82
      %p94 = scmp.eq.s32.totalorder %s18, 1
      %p95 = por %p93, %p94
      %p97 = scmp.ne.s32.totalorder %s82, %s96
      %p98 = scmp.eq.s32.totalorder %s18, 0
      %p99 = por %p97, %p98
      %s100 = ssub.s32 %s19, %s31
      %s101 = ssub.s32 %s20, %s27
      %s102 = sor.u32 %s100, %s101
      %p103 = scmp.eq.s32.totalorder %s102, 0
      %s105 = sadd.s32 %s104, 1
      %s106 = scalar_select %p103, %s104, %s105
      %p109 = pneg %p103
      %p110 = scmp.eq.s32.totalorder %s12, 1
      %p111 = por %p109, %p110
      %p112 = scmp.ne.s32.totalorder %s104, %s107
      %p113 = scmp.eq.s32.totalorder %s12, 0
      %p114 = por %p112, %p113
      %p115 = scmp.ne.s32.totalorder %s104, %s107
      %p116 = scmp.eq.s32.totalorder %s17, 1
      %p117 = por %p115, %p116
      %p118 = scmp.ne.s32.totalorder %s107, %s108
      %p119 = scmp.eq.s32.totalorder %s17, 0
      %p120 = por %p118, %p119
      %p121 = scmp.ne.s32.totalorder %s107, %s108
      %p122 = scmp.eq.s32.totalorder %s18, 1
      %p123 = por %p121, %p122
      %p125 = scmp.ne.s32.totalorder %s108, %s124
      %p126 = scmp.eq.s32.totalorder %s18, 0
      %p127 = por %p125, %p126
      %p128 = scmp.le.s32.totalorder 1, %s12
      %p129 = scmp.lt.s32.totalorder %s12, 3
      %p130 = pnand %p128, %p129
      %p131 = pneg %p130
      // Predicated region
      $region9: #{tpu_custom_call.1} parent=5 // pred_check
        _
      $region10: #{tpu_custom_call.1} parent=5 // pred_check_branch
        %133 = sbr.rel (%p130) target = $region12
      $region11: #{tpu_custom_call.1} parent=5 // pred_region
        %s134 = ssub.s32 %s12, 1
        // Predicated region
        $region13: #{tpu_custom_call.1} parent=11 // pred_check
          %p135 = pneg %p71
        $region14: #{tpu_custom_call.1} parent=11 // pred_check_branch
          %137 = sbr.rel (%p135) target = $region16
        $region15: #{tpu_custom_call.1} parent=11 // pred_region
          _
        $region16: #{tpu_custom_call.1} parent=11 // pred_fallthru
          _
        // Predicated region
        $region17: #{tpu_custom_call.1} parent=11 // pred_check
          %p138 = pneg %p92
        $region18: #{tpu_custom_call.1} parent=11 // pred_check_branch
          %140 = sbr.rel (%p138) target = $region20
        $region19: #{tpu_custom_call.1} parent=11 // pred_region
          _
        $region20: #{tpu_custom_call.1} parent=11 // pred_fallthru
          _
      $region12: #{tpu_custom_call.1} parent=5 // pred_fallthru
        _
      %p141 = scmp.lt.s32.totalorder %s12, 2
      // Predicated region
      $region21: #{tpu_custom_call.1} parent=5 // pred_check
        %p142 = pneg %p141
      $region22: #{tpu_custom_call.1} parent=5 // pred_check_branch
        %144 = sbr.rel (%p142) target = $region24
      $region23: #{tpu_custom_call.1} parent=5 // pred_region
        // Predicated region
        $region25: #{tpu_custom_call.1} parent=23 // pred_check
          %p145 = pneg %p44
        $region26: #{tpu_custom_call.1} parent=23 // pred_check_branch
          %147 = sbr.rel (%p145) target = $region28
        $region27: #{tpu_custom_call.1} parent=23 // pred_region
          %p148 = scmp.lt.s32.totalorder %s19, 1
          %s149 = scalar_select %p148, %s19, 1
          %s150 = smul.addr %s149, 51
          %s151 = smul.addr %s150, 4
          %s152 = scalar_lea.vmem %s0, %s151
        $region28: #{tpu_custom_call.1} parent=23 // pred_fallthru
          _
      $region24: #{tpu_custom_call.1} parent=5 // pred_fallthru
        _
      %p153 = scmp.le.s32.totalorder 1, %s12
      %p154 = scmp.lt.s32.totalorder %s12, 3
      %p155 = pnand %p153, %p154
      %p156 = pneg %p155
      // Predicated region
      $region29: #{tpu_custom_call.1} parent=5 // pred_check
        _
      $region30: #{tpu_custom_call.1} parent=5 // pred_check_branch
        %158 = sbr.rel (%p155) target = $region32
      $region31: #{tpu_custom_call.1} parent=5 // pred_region
        %s159 = ssub.s32 %s12, 1
        %p160 = scmp.lt.s32.totalorder %s21, 1
        %s161 = scalar_select %p160, %s21, 1
        %s162 = smul.addr %s161, 51
        %s163 = smul.addr %s162, 4
        %s164 = scalar_lea.vmem %s0, %s163
        %p165 = pneg %p50
        %p166 = pneg %p47
        %p167 = pneg %p71
        %p168 = pneg %p68
        %p169 = pneg %p92
        %p170 = pneg %p89
        %p171 = pneg %p120
        %p172 = pneg %p117
        %s173 = sand.u32 %s107, 1
        %s174 = scalar_lea.sflag [#allocation3], %s173
        %s175 = sand.u32 %s107, 1
        %s176 = smul.addr %s175, 512
        %s177 = scalar_lea.vmem [#allocation2], %s176
        %p178 = scmp.lt.s32.totalorder %s21, 1
        %s179 = scalar_select %p178, %s21, 1
        %s180 = smul.addr %s179, 51
        %s181 = smul.addr %s180, 4
        %s182 = scalar_lea.vmem %s0, %s181
        %s183 = smul.u32 32, %s22
        %s185 = smul.u32 %s22, 16
        %v186 = vld [vmem:[%s2] sm:$0x1]
        %v188 = vperm.slane %v186, 0
        %s190 = smul.u32 %s185, 3
        %s191 = smul.addr %s190, 4
        %s192 = scalar_lea.vmem %s182, %s191
        %v193 = vld [vmem:[%s192] sm:$0xf]
        %v194 = vld [vmem:[%s192 + $0x4] sm:$0xf]
        %v195 = vld [vmem:[%s192 + $0xc] sm:$0xf]
        %v196 = vld [vmem:[%s192 + $0x10] sm:$0xf]
        %v197 = vld [vmem:[%s192 + $0x18] sm:$0xf]
        %v198 = vld [vmem:[%s192 + $0x1c] sm:$0xf]
        %v199 = vld [vmem:[%s192 + $0x24] sm:$0xf]
        %v200 = vld [vmem:[%s192 + $0x28] sm:$0xf]
        %v201 = vld [vmem:[%s192 + $0x30] sm:$0xf]
        %v202 = vld [vmem:[%s192 + $0x34] sm:$0xf]
        %v203 = vld [vmem:[%s192 + $0x3c] sm:$0xf]
        %v204 = vld [vmem:[%s192 + $0x40] sm:$0xf]
        %v205 = vld [vmem:[%s192 + $0x48] sm:$0xf]
        %v206 = vld [vmem:[%s192 + $0x4c] sm:$0xf]
        %v207 = vld [vmem:[%s192 + $0x54] sm:$0xf]
        %v208 = vld [vmem:[%s192 + $0x58] sm:$0xf]
        %v209 = vld [vmem:[%s192 + $0x60] sm:$0xf]
        %v210 = vld [vmem:[%s192 + $0x64] sm:$0xf]
        %v211 = vld [vmem:[%s192 + $0x6c] sm:$0xf]
        %v212 = vld [vmem:[%s192 + $0x70] sm:$0xf]
        %v213 = vld [vmem:[%s192 + $0x78] sm:$0xf]
        %v214 = vld [vmem:[%s192 + $0x7c] sm:$0xf]
        %v215 = vld [vmem:[%s192 + $0x84] sm:$0xf]
        %v216 = vld [vmem:[%s192 + $0x88] sm:$0xf]
        %v217 = vld [vmem:[%s192 + $0x90] sm:$0xf]
        %v218 = vld [vmem:[%s192 + $0x94] sm:$0xf]
        %v219 = vld [vmem:[%s192 + $0x9c] sm:$0xf]
        %v220 = vld [vmem:[%s192 + $0xa0] sm:$0xf]
        %v221 = vld [vmem:[%s192 + $0xa8] sm:$0xf]
        %v222 = vld [vmem:[%s192 + $0xac] sm:$0xf]
        %v223 = vld [vmem:[%s192 + $0xb4] sm:$0xf]
        %v224 = vld [vmem:[%s192 + $0xb8] sm:$0xf]
        %v225 = vld [vmem:[%s1] sm:$0x3]
        %v258 = vunpack.c.l.b16 %v193
        %v259 = vunpack.c.l.b16 %v194
        %v260 = vunpack.c.l.b16 %v195
        %v261 = vunpack.c.l.b16 %v196
        %v262 = vunpack.c.l.b16 %v197
        %v263 = vunpack.c.l.b16 %v198
        %v264 = vunpack.c.l.b16 %v199
        %v265 = vunpack.c.l.b16 %v200
        %v266 = vunpack.c.l.b16 %v201
        %v267 = vunpack.c.l.b16 %v202
        %v268 = vunpack.c.l.b16 %v203
        %v269 = vunpack.c.l.b16 %v204
        %v270 = vunpack.c.l.b16 %v205
        %v271 = vunpack.c.l.b16 %v206
        %v272 = vunpack.c.l.b16 %v207
        %v273 = vunpack.c.l.b16 %v208
        %v274 = vunpack.c.l.b16 %v209
        %v275 = vunpack.c.l.b16 %v210
        %v276 = vunpack.c.l.b16 %v211
        %v277 = vunpack.c.l.b16 %v212
        %v278 = vunpack.c.l.b16 %v213
        %v279 = vunpack.c.l.b16 %v214
        %v280 = vunpack.c.l.b16 %v215
        %v281 = vunpack.c.l.b16 %v216
        %v282 = vunpack.c.l.b16 %v217
        %v283 = vunpack.c.l.b16 %v218
        %v284 = vunpack.c.l.b16 %v219
        %v285 = vunpack.c.l.b16 %v220
        %v286 = vunpack.c.l.b16 %v221
        %v287 = vunpack.c.l.b16 %v222
        %v288 = vunpack.c.l.b16 %v223
        %v289 = vunpack.c.l.b16 %v224
        %v290 = vpack.c.b16 %v259, %v258
        %v291 = vpack.c.b16 %v261, %v260
        %v292 = vpack.c.b16 %v263, %v262
        %v293 = vpack.c.b16 %v265, %v264
        %v294 = vpack.c.b16 %v267, %v266
        %v295 = vpack.c.b16 %v269, %v268
        %v296 = vpack.c.b16 %v271, %v270
        %v297 = vpack.c.b16 %v273, %v272
        %v298 = vpack.c.b16 %v275, %v274
        %v299 = vpack.c.b16 %v277, %v276
        %v300 = vpack.c.b16 %v279, %v278
        %v301 = vpack.c.b16 %v281, %v280
        %v302 = vpack.c.b16 %v283, %v282
        %v303 = vpack.c.b16 %v285, %v284
        %v304 = vpack.c.b16 %v287, %v286
        %v305 = vpack.c.b16 %v289, %v288
        %vm306 = vcmask 31744
        %v308 = vsel %vm306, %v290, 0
        %v311 = vsel %vm306, %v291, 0
        %v314 = vsel %vm306, %v292, 0
        %v317 = vsel %vm306, %v293, 0
        %v320 = vsel %vm306, %v294, 0
        %v323 = vsel %vm306, %v295, 0
        %v326 = vsel %vm306, %v296, 0
        %v329 = vsel %vm306, %v297, 0
        %v332 = vsel %vm306, %v298, 0
        %v335 = vsel %vm306, %v299, 0
        %v338 = vsel %vm306, %v300, 0
        %v341 = vsel %vm306, %v301, 0
        %v344 = vsel %vm306, %v302, 0
        %v347 = vsel %vm306, %v303, 0
        %v350 = vsel %vm306, %v304, 0
        %v353 = vsel %vm306, %v305, 0
        %vm355 = vcmask 1041408
        %v357 = vsel %vm355, %v225, 0
        %359 = vmatpush.bf16.msra.mxu0 0
        %360 = vmatpush.bf16.msra.mxu0 0
        %361 = vmatpush.bf16.msra.mxu0 0
        %362 = vmatpush.bf16.msra.mxu0 0
        %363 = vmatpush.bf16.msra.mxu0 0
        %364 = vmatpush.bf16.msra.mxu0 0
        %365 = vmatpush.bf16.msra.mxu0 0
        %366 = vmatpush.bf16.msra.mxu0 %v357
        %367 = vmatmul.bf16.gmra.mxu0 %v308
        %v368 = vpop.f32.mrf.mxu0
        %v369 = vadd.f32 %v188, %v368
        %v370 = vpop.f32.mrf.mxu0
        %v371 = vadd.f32 %v188, %v370
        %372 = vmatmul.bf16.gmra.mxu0 %v311
        %v373 = vpop.f32.mrf.mxu0
        %v374 = vadd.f32 %v188, %v373
        %v375 = vpop.f32.mrf.mxu0
        %v376 = vadd.f32 %v188, %v375
        %377 = vmatmul.bf16.gmra.mxu0 %v314
        %v378 = vpop.f32.mrf.mxu0
        %v379 = vadd.f32 %v188, %v378
        %v380 = vpop.f32.mrf.mxu0
        %v381 = vadd.f32 %v188, %v380
        %382 = vmatmul.bf16.gmra.mxu0 %v317
        %v383 = vpop.f32.mrf.mxu0
        %v384 = vadd.f32 %v188, %v383
        %v385 = vpop.f32.mrf.mxu0
        %v386 = vadd.f32 %v188, %v385
        %387 = vmatmul.bf16.gmra.mxu0 %v320
        %v388 = vpop.f32.mrf.mxu0
        %v389 = vadd.f32 %v188, %v388
        %v390 = vpop.f32.mrf.mxu0
        %v391 = vadd.f32 %v188, %v390
        %392 = vmatmul.bf16.gmra.mxu0 %v323
        %v393 = vpop.f32.mrf.mxu0
        %v394 = vadd.f32 %v188, %v393
        %v395 = vpop.f32.mrf.mxu0
        %v396 = vadd.f32 %v188, %v395
        %397 = vmatmul.bf16.gmra.mxu0 %v326
        %v398 = vpop.f32.mrf.mxu0
        %v399 = vadd.f32 %v188, %v398
        %v400 = vpop.f32.mrf.mxu0
        %v401 = vadd.f32 %v188, %v400
        %402 = vmatmul.bf16.gmra.mxu0 %v329
        %v403 = vpop.f32.mrf.mxu0
        %v404 = vadd.f32 %v188, %v403
        %v405 = vpop.f32.mrf.mxu0
        %v406 = vadd.f32 %v188, %v405
        %407 = vmatmul.bf16.gmra.mxu0 %v332
        %v408 = vpop.f32.mrf.mxu0
        %v409 = vadd.f32 %v188, %v408
        %v410 = vpop.f32.mrf.mxu0
        %v411 = vadd.f32 %v188, %v410
        %412 = vmatmul.bf16.gmra.mxu0 %v335
        %v413 = vpop.f32.mrf.mxu0
        %v414 = vadd.f32 %v188, %v413
        %v415 = vpop.f32.mrf.mxu0
        %v416 = vadd.f32 %v188, %v415
        %417 = vmatmul.bf16.gmra.mxu0 %v338
        %v418 = vpop.f32.mrf.mxu0
        %v419 = vadd.f32 %v188, %v418
        %v420 = vpop.f32.mrf.mxu0
        %v421 = vadd.f32 %v188, %v420
        %422 = vmatmul.bf16.gmra.mxu0 %v341
        %v423 = vpop.f32.mrf.mxu0
        %v424 = vadd.f32 %v188, %v423
        %v425 = vpop.f32.mrf.mxu0
        %v426 = vadd.f32 %v188, %v425
        %427 = vmatmul.bf16.gmra.mxu0 %v344
        %v428 = vpop.f32.mrf.mxu0
        %v429 = vadd.f32 %v188, %v428
        %v430 = vpop.f32.mrf.mxu0
        %v431 = vadd.f32 %v188, %v430
        %432 = vmatmul.bf16.gmra.mxu0 %v347
        %v433 = vpop.f32.mrf.mxu0
        %v434 = vadd.f32 %v188, %v433
        %v435 = vpop.f32.mrf.mxu0
        %v436 = vadd.f32 %v188, %v435
        %437 = vmatmul.bf16.gmra.mxu0 %v350
        %v438 = vpop.f32.mrf.mxu0
        %v439 = vadd.f32 %v188, %v438
        %v440 = vpop.f32.mrf.mxu0
        %v441 = vadd.f32 %v188, %v440
        %442 = vmatmul.bf16.gmra.mxu0 %v353
        %v443 = vpop.f32.mrf.mxu0
        %v444 = vadd.f32 %v188, %v443
        %v445 = vpop.f32.mrf.mxu0
        %v446 = vadd.f32 %v188, %v445
        %447 = vdwg.mxu0
        %v448 = vmax.f32 %v369, 0.0
        %v449 = vmax.f32 %v371, 0.0
        %v450 = vmax.f32 %v374, 0.0
        %v451 = vmax.f32 %v376, 0.0
        %v452 = vmax.f32 %v379, 0.0
        %v453 = vmax.f32 %v381, 0.0
        %v454 = vmax.f32 %v384, 0.0
        %v455 = vmax.f32 %v386, 0.0
        %v456 = vmax.f32 %v389, 0.0
        %v457 = vmax.f32 %v391, 0.0
        %v458 = vmax.f32 %v394, 0.0
        %v459 = vmax.f32 %v396, 0.0
        %v460 = vmax.f32 %v399, 0.0
        %v461 = vmax.f32 %v401, 0.0
        %v462 = vmax.f32 %v404, 0.0
        %v463 = vmax.f32 %v406, 0.0
        %v464 = vmax.f32 %v409, 0.0
        %v465 = vmax.f32 %v411, 0.0
        %v466 = vmax.f32 %v414, 0.0
        %v467 = vmax.f32 %v416, 0.0
        %v468 = vmax.f32 %v419, 0.0
        %v469 = vmax.f32 %v421, 0.0
        %v470 = vmax.f32 %v424, 0.0
        %v471 = vmax.f32 %v426, 0.0
        %v472 = vmax.f32 %v429, 0.0
        %v473 = vmax.f32 %v431, 0.0
        %v474 = vmax.f32 %v434, 0.0
        %v475 = vmax.f32 %v436, 0.0
        %v476 = vmax.f32 %v439, 0.0
        %v477 = vmax.f32 %v441, 0.0
        %v478 = vmax.f32 %v444, 0.0
        %v479 = vmax.f32 %v446, 0.0
        %v480 = vpack.c.bf16 %v448, %v448
        %v481 = vpack.c.bf16 %v449, %v449
        %v482 = vpack.c.bf16 %v450, %v450
        %v483 = vpack.c.bf16 %v451, %v451
        %v484 = vpack.c.bf16 %v452, %v452
        %v485 = vpack.c.bf16 %v453, %v453
        %v486 = vpack.c.bf16 %v454, %v454
        %v487 = vpack.c.bf16 %v455, %v455
        %v488 = vpack.c.bf16 %v456, %v456
        %v489 = vpack.c.bf16 %v457, %v457
        %v490 = vpack.c.bf16 %v458, %v458
        %v491 = vpack.c.bf16 %v459, %v459
        %v492 = vpack.c.bf16 %v460, %v460
        %v493 = vpack.c.bf16 %v461, %v461
        %v494 = vpack.c.bf16 %v462, %v462
        %v495 = vpack.c.bf16 %v463, %v463
        %v496 = vpack.c.bf16 %v464, %v464
        %v497 = vpack.c.bf16 %v465, %v465
        %v498 = vpack.c.bf16 %v466, %v466
        %v499 = vpack.c.bf16 %v467, %v467
        %v500 = vpack.c.bf16 %v468, %v468
        %v501 = vpack.c.bf16 %v469, %v469
        %v502 = vpack.c.bf16 %v470, %v470
        %v503 = vpack.c.bf16 %v471, %v471
        %v504 = vpack.c.bf16 %v472, %v472
        %v505 = vpack.c.bf16 %v473, %v473
        %v506 = vpack.c.bf16 %v474, %v474
        %v507 = vpack.c.bf16 %v475, %v475
        %v508 = vpack.c.bf16 %v476, %v476
        %v509 = vpack.c.bf16 %v477, %v477
        %v510 = vpack.c.bf16 %v478, %v478
        %v511 = vpack.c.bf16 %v479, %v479
        %512 = vst [vmem:[%s177] sm:$0xf] %v480
        %513 = vst [vmem:[%s177 + $0x4] sm:$0xf] %v481
        %514 = vst [vmem:[%s177 + $0x8] sm:$0xf] %v482
        %515 = vst [vmem:[%s177 + $0xc] sm:$0xf] %v483
        %516 = vst [vmem:[%s177 + $0x10] sm:$0xf] %v484
        %517 = vst [vmem:[%s177 + $0x14] sm:$0xf] %v485
        %518 = vst [vmem:[%s177 + $0x18] sm:$0xf] %v486
        %519 = vst [vmem:[%s177 + $0x1c] sm:$0xf] %v487
        %520 = vst [vmem:[%s177 + $0x20] sm:$0xf] %v488
        %521 = vst [vmem:[%s177 + $0x24] sm:$0xf] %v489
        %522 = vst [vmem:[%s177 + $0x28] sm:$0xf] %v490
        %523 = vst [vmem:[%s177 + $0x2c] sm:$0xf] %v491
        %524 = vst [vmem:[%s177 + $0x30] sm:$0xf] %v492
        %525 = vst [vmem:[%s177 + $0x34] sm:$0xf] %v493
        %526 = vst [vmem:[%s177 + $0x38] sm:$0xf] %v494
        %527 = vst [vmem:[%s177 + $0x3c] sm:$0xf] %v495
        %528 = vst [vmem:[%s177 + $0x40] sm:$0xf] %v496
        %529 = vst [vmem:[%s177 + $0x44] sm:$0xf] %v497
        %530 = vst [vmem:[%s177 + $0x48] sm:$0xf] %v498
        %531 = vst [vmem:[%s177 + $0x4c] sm:$0xf] %v499
        %532 = vst [vmem:[%s177 + $0x50] sm:$0xf] %v500
        %533 = vst [vmem:[%s177 + $0x54] sm:$0xf] %v501
        %534 = vst [vmem:[%s177 + $0x58] sm:$0xf] %v502
        %535 = vst [vmem:[%s177 + $0x5c] sm:$0xf] %v503
        %536 = vst [vmem:[%s177 + $0x60] sm:$0xf] %v504
        %537 = vst [vmem:[%s177 + $0x64] sm:$0xf] %v505
        %538 = vst [vmem:[%s177 + $0x68] sm:$0xf] %v506
        %539 = vst [vmem:[%s177 + $0x6c] sm:$0xf] %v507
        %540 = vst [vmem:[%s177 + $0x70] sm:$0xf] %v508
        %541 = vst [vmem:[%s177 + $0x74] sm:$0xf] %v509
        %542 = vst [vmem:[%s177 + $0x78] sm:$0xf] %v510
        %543 = vst [vmem:[%s177 + $0x7c] sm:$0xf] %v511
        %s544 = scalar_lea.vmem %s1, 2
        %v545 = vld [vmem:[%s544] sm:$0x3]
        %v546 = vld [vmem:[%s192] sm:$0xf]
        %v547 = vld [vmem:[%s192 + $0x4] sm:$0xf]
        %v548 = vld [vmem:[%s192 + $0x8] sm:$0x1]
        %v549 = vld [vmem:[%s192 + $0xc] sm:$0xf]
        %v550 = vld [vmem:[%s192 + $0x10] sm:$0xf]
        %v551 = vld [vmem:[%s192 + $0x14] sm:$0x1]
        %v552 = vld [vmem:[%s192 + $0x18] sm:$0xf]
        %v553 = vld [vmem:[%s192 + $0x1c] sm:$0xf]
        %v554 = vld [vmem:[%s192 + $0x20] sm:$0x1]
        %v555 = vld [vmem:[%s192 + $0x24] sm:$0xf]
        %v556 = vld [vmem:[%s192 + $0x28] sm:$0xf]
        %v557 = vld [vmem:[%s192 + $0x2c] sm:$0x1]
        %v558 = vld [vmem:[%s192 + $0x30] sm:$0xf]
        %v559 = vld [vmem:[%s192 + $0x34] sm:$0xf]
        %v560 = vld [vmem:[%s192 + $0x38] sm:$0x1]
        %v561 = vld [vmem:[%s192 + $0x3c] sm:$0xf]
        %v562 = vld [vmem:[%s192 + $0x40] sm:$0xf]
        %v563 = vld [vmem:[%s192 + $0x44] sm:$0x1]
        %v564 = vld [vmem:[%s192 + $0x48] sm:$0xf]
        %v565 = vld [vmem:[%s192 + $0x4c] sm:$0xf]
        %v566 = vld [vmem:[%s192 + $0x50] sm:$0x1]
        %v567 = vld [vmem:[%s192 + $0x54] sm:$0xf]
        %v568 = vld [vmem:[%s192 + $0x58] sm:$0xf]
        %v569 = vld [vmem:[%s192 + $0x5c] sm:$0x1]
        %v570 = vld [vmem:[%s192 + $0x60] sm:$0xf]
        %v571 = vld [vmem:[%s192 + $0x64] sm:$0xf]
        %v572 = vld [vmem:[%s192 + $0x68] sm:$0x1]
        %v573 = vld [vmem:[%s192 + $0x6c] sm:$0xf]
        %v574 = vld [vmem:[%s192 + $0x70] sm:$0xf]
        %v575 = vld [vmem:[%s192 + $0x74] sm:$0x1]
        %v576 = vld [vmem:[%s192 + $0x78] sm:$0xf]
        %v577 = vld [vmem:[%s192 + $0x7c] sm:$0xf]
        %v578 = vld [vmem:[%s192 + $0x80] sm:$0x1]
        %v579 = vld [vmem:[%s192 + $0x84] sm:$0xf]
        %v580 = vld [vmem:[%s192 + $0x88] sm:$0xf]
        %v581 = vld [vmem:[%s192 + $0x8c] sm:$0x1]
        %v582 = vld [vmem:[%s192 + $0x90] sm:$0xf]
        %v583 = vld [vmem:[%s192 + $0x94] sm:$0xf]
        %v584 = vld [vmem:[%s192 + $0x98] sm:$0x1]
        %v585 = vld [vmem:[%s192 + $0x9c] sm:$0xf]
        %v586 = vld [vmem:[%s192 + $0xa0] sm:$0xf]
        %v587 = vld [vmem:[%s192 + $0xa4] sm:$0x1]
        %v588 = vld [vmem:[%s192 + $0xa8] sm:$0xf]
        %v589 = vld [vmem:[%s192 + $0xac] sm:$0xf]
        %v590 = vld [vmem:[%s192 + $0xb0] sm:$0x1]
        %v591 = vld [vmem:[%s192 + $0xb4] sm:$0xf]
        %v592 = vld [vmem:[%s192 + $0xb8] sm:$0xf]
        %v593 = vld [vmem:[%s192 + $0xbc] sm:$0x1]
        %vm594 = vsmask.f32 3328
        %vm595 = vsmask.f32 7440
        %vm596 = vmor %vm594, %vm595
        %v598 = vshrl.u32 %v546, 16
        %v600 = vrot.slane %v598, 4
        %v601 = vshll.u32 %v546, 16
        %v603 = vrot.slane %v601, 5
        %v604 = vor.u32 %v600, %v603
        %v605 = vrot.slane %v604, 4
        %v607 = vshll.u32 %v547, 16
        %v609 = vrot.slane %v607, 5
        %v610 = vsel %vm596, %v605, %v609
        %v611 = vshrl.u32 %v547, 16
        %v613 = vrot.slane %v611, 4
        %v614 = vor.u32 %v613, %v609
        %v615 = vrot.slane %v614, 4
        %v617 = vshll.u32 %v548, 16
        %v619 = vrot.slane %v617, 5
        %v620 = vsel %vm596, %v615, %v619
        %v622 = vshrl.u32 %v549, 16
        %v624 = vrot.slane %v622, 4
        %v625 = vshll.u32 %v549, 16
        %v627 = vrot.slane %v625, 5
        %v628 = vor.u32 %v624, %v627
        %v629 = vrot.slane %v628, 4
        %v631 = vshll.u32 %v550, 16
        %v633 = vrot.slane %v631, 5
        %v634 = vsel %vm596, %v629, %v633
        %v635 = vshrl.u32 %v550, 16
        %v637 = vrot.slane %v635, 4
        %v638 = vor.u32 %v637, %v633
        %v639 = vrot.slane %v638, 4
        %v641 = vshll.u32 %v551, 16
        %v643 = vrot.slane %v641, 5
        %v644 = vsel %vm596, %v639, %v643
        %v646 = vshrl.u32 %v552, 16
        %v648 = vrot.slane %v646, 4
        %v649 = vshll.u32 %v552, 16
        %v651 = vrot.slane %v649, 5
        %v652 = vor.u32 %v648, %v651
        %v653 = vrot.slane %v652, 4
        %v655 = vshll.u32 %v553, 16
        %v657 = vrot.slane %v655, 5
        %v658 = vsel %vm596, %v653, %v657
        %v659 = vshrl.u32 %v553, 16
        %v661 = vrot.slane %v659, 4
        %v662 = vor.u32 %v661, %v657
        %v663 = vrot.slane %v662, 4
        %v665 = vshll.u32 %v554, 16
        %v667 = vrot.slane %v665, 5
        %v668 = vsel %vm596, %v663, %v667
        %v670 = vshrl.u32 %v555, 16
        %v672 = vrot.slane %v670, 4
        %v673 = vshll.u32 %v555, 16
        %v675 = vrot.slane %v673, 5
        %v676 = vor.u32 %v672, %v675
        %v677 = vrot.slane %v676, 4
        %v679 = vshll.u32 %v556, 16
        %v681 = vrot.slane %v679, 5
        %v682 = vsel %vm596, %v677, %v681
        %v683 = vshrl.u32 %v556, 16
        %v685 = vrot.slane %v683, 4
        %v686 = vor.u32 %v685, %v681
        %v687 = vrot.slane %v686, 4
        %v689 = vshll.u32 %v557, 16
        %v691 = vrot.slane %v689, 5
        %v692 = vsel %vm596, %v687, %v691
        %v694 = vshrl.u32 %v558, 16
        %v696 = vrot.slane %v694, 4
        %v697 = vshll.u32 %v558, 16
        %v699 = vrot.slane %v697, 5
        %v700 = vor.u32 %v696, %v699
        %v701 = vrot.slane %v700, 4
        %v703 = vshll.u32 %v559, 16
        %v705 = vrot.slane %v703, 5
        %v706 = vsel %vm596, %v701, %v705
        %v707 = vshrl.u32 %v559, 16
        %v709 = vrot.slane %v707, 4
        %v710 = vor.u32 %v709, %v705
        %v711 = vrot.slane %v710, 4
        %v713 = vshll.u32 %v560, 16
        %v715 = vrot.slane %v713, 5
        %v716 = vsel %vm596, %v711, %v715
        %v718 = vshrl.u32 %v561, 16
        %v720 = vrot.slane %v718, 4
        %v721 = vshll.u32 %v561, 16
        %v723 = vrot.slane %v721, 5
        %v724 = vor.u32 %v720, %v723
        %v725 = vrot.slane %v724, 4
        %v727 = vshll.u32 %v562, 16
        %v729 = vrot.slane %v727, 5
        %v730 = vsel %vm596, %v725, %v729
        %v731 = vshrl.u32 %v562, 16
        %v733 = vrot.slane %v731, 4
        %v734 = vor.u32 %v733, %v729
        %v735 = vrot.slane %v734, 4
        %v737 = vshll.u32 %v563, 16
        %v739 = vrot.slane %v737, 5
        %v740 = vsel %vm596, %v735, %v739
        %v742 = vshrl.u32 %v564, 16
        %v744 = vrot.slane %v742, 4
        %v745 = vshll.u32 %v564, 16
        %v747 = vrot.slane %v745, 5
        %v748 = vor.u32 %v744, %v747
        %v749 = vrot.slane %v748, 4
        %v751 = vshll.u32 %v565, 16
        %v753 = vrot.slane %v751, 5
        %v754 = vsel %vm596, %v749, %v753
        %v755 = vshrl.u32 %v565, 16
        %v757 = vrot.slane %v755, 4
        %v758 = vor.u32 %v757, %v753
        %v759 = vrot.slane %v758, 4
        %v761 = vshll.u32 %v566, 16
        %v763 = vrot.slane %v761, 5
        %v764 = vsel %vm596, %v759, %v763
        %v766 = vshrl.u32 %v567, 16
        %v768 = vrot.slane %v766, 4
        %v769 = vshll.u32 %v567, 16
        %v771 = vrot.slane %v769, 5
        %v772 = vor.u32 %v768, %v771
        %v773 = vrot.slane %v772, 4
        %v775 = vshll.u32 %v568, 16
        %v777 = vrot.slane %v775, 5
        %v778 = vsel %vm596, %v773, %v777
        %v779 = vshrl.u32 %v568, 16
        %v781 = vrot.slane %v779, 4
        %v782 = vor.u32 %v781, %v777
        %v783 = vrot.slane %v782, 4
        %v785 = vshll.u32 %v569, 16
        %v787 = vrot.slane %v785, 5
        %v788 = vsel %vm596, %v783, %v787
        %v790 = vshrl.u32 %v570, 16
        %v792 = vrot.slane %v790, 4
        %v793 = vshll.u32 %v570, 16
        %v795 = vrot.slane %v793, 5
        %v796 = vor.u32 %v792, %v795
        %v797 = vrot.slane %v796, 4
        %v799 = vshll.u32 %v571, 16
        %v801 = vrot.slane %v799, 5
        %v802 = vsel %vm596, %v797, %v801
        %v803 = vshrl.u32 %v571, 16
        %v805 = vrot.slane %v803, 4
        %v806 = vor.u32 %v805, %v801
        %v807 = vrot.slane %v806, 4
        %v809 = vshll.u32 %v572, 16
        %v811 = vrot.slane %v809, 5
        %v812 = vsel %vm596, %v807, %v811
        %v814 = vshrl.u32 %v573, 16
        %v816 = vrot.slane %v814, 4
        %v817 = vshll.u32 %v573, 16
        %v819 = vrot.slane %v817, 5
        %v820 = vor.u32 %v816, %v819
        %v821 = vrot.slane %v820, 4
        %v823 = vshll.u32 %v574, 16
        %v825 = vrot.slane %v823, 5
        %v826 = vsel %vm596, %v821, %v825
        %v827 = vshrl.u32 %v574, 16
        %v829 = vrot.slane %v827, 4
        %v830 = vor.u32 %v829, %v825
        %v831 = vrot.slane %v830, 4
        %v833 = vshll.u32 %v575, 16
        %v835 = vrot.slane %v833, 5
        %v836 = vsel %vm596, %v831, %v835
        %v838 = vshrl.u32 %v576, 16
        %v840 = vrot.slane %v838, 4
        %v841 = vshll.u32 %v576, 16
        %v843 = vrot.slane %v841, 5
        %v844 = vor.u32 %v840, %v843
        %v845 = vrot.slane %v844, 4
        %v847 = vshll.u32 %v577, 16
        %v849 = vrot.slane %v847, 5
        %v850 = vsel %vm596, %v845, %v849
        %v851 = vshrl.u32 %v577, 16
        %v853 = vrot.slane %v851, 4
        %v854 = vor.u32 %v853, %v849
        %v855 = vrot.slane %v854, 4
        %v857 = vshll.u32 %v578, 16
        %v859 = vrot.slane %v857, 5
        %v860 = vsel %vm596, %v855, %v859
        %v862 = vshrl.u32 %v579, 16
        %v864 = vrot.slane %v862, 4
        %v865 = vshll.u32 %v579, 16
        %v867 = vrot.slane %v865, 5
        %v868 = vor.u32 %v864, %v867
        %v869 = vrot.slane %v868, 4
        %v871 = vshll.u32 %v580, 16
        %v873 = vrot.slane %v871, 5
        %v874 = vsel %vm596, %v869, %v873
        %v875 = vshrl.u32 %v580, 16
        %v877 = vrot.slane %v875, 4
        %v878 = vor.u32 %v877, %v873
        %v879 = vrot.slane %v878, 4
        %v881 = vshll.u32 %v581, 16
        %v883 = vrot.slane %v881, 5
        %v884 = vsel %vm596, %v879, %v883
        %v886 = vshrl.u32 %v582, 16
        %v888 = vrot.slane %v886, 4
        %v889 = vshll.u32 %v582, 16
        %v891 = vrot.slane %v889, 5
        %v892 = vor.u32 %v888, %v891
        %v893 = vrot.slane %v892, 4
        %v895 = vshll.u32 %v583, 16
        %v897 = vrot.slane %v895, 5
        %v898 = vsel %vm596, %v893, %v897
        %v899 = vshrl.u32 %v583, 16
        %v901 = vrot.slane %v899, 4
        %v902 = vor.u32 %v901, %v897
        %v903 = vrot.slane %v902, 4
        %v905 = vshll.u32 %v584, 16
        %v907 = vrot.slane %v905, 5
        %v908 = vsel %vm596, %v903, %v907
        %v910 = vshrl.u32 %v585, 16
        %v912 = vrot.slane %v910, 4
        %v913 = vshll.u32 %v585, 16
        %v915 = vrot.slane %v913, 5
        %v916 = vor.u32 %v912, %v915
        %v917 = vrot.slane %v916, 4
        %v919 = vshll.u32 %v586, 16
        %v921 = vrot.slane %v919, 5
        %v922 = vsel %vm596, %v917, %v921
        %v923 = vshrl.u32 %v586, 16
        %v925 = vrot.slane %v923, 4
        %v926 = vor.u32 %v925, %v921
        %v927 = vrot.slane %v926, 4
        %v929 = vshll.u32 %v587, 16
        %v931 = vrot.slane %v929, 5
        %v932 = vsel %vm596, %v927, %v931
        %v934 = vshrl.u32 %v588, 16
        %v936 = vrot.slane %v934, 4
        %v937 = vshll.u32 %v588, 16
        %v939 = vrot.slane %v937, 5
        %v940 = vor.u32 %v936, %v939
        %v941 = vrot.slane %v940, 4
        %v943 = vshll.u32 %v589, 16
        %v945 = vrot.slane %v943, 5
        %v946 = vsel %vm596, %v941, %v945
        %v947 = vshrl.u32 %v589, 16
        %v949 = vrot.slane %v947, 4
        %v950 = vor.u32 %v949, %v945
        %v951 = vrot.slane %v950, 4
        %v953 = vshll.u32 %v590, 16
        %v955 = vrot.slane %v953, 5
        %v956 = vsel %vm596, %v951, %v955
        %v958 = vshrl.u32 %v591, 16
        %v960 = vrot.slane %v958, 4
        %v961 = vshll.u32 %v591, 16
        %v963 = vrot.slane %v961, 5
        %v964 = vor.u32 %v960, %v963
        %v965 = vrot.slane %v964, 4
        %v967 = vshll.u32 %v592, 16
        %v969 = vrot.slane %v967, 5
        %v970 = vsel %vm596, %v965, %v969
        %v971 = vshrl.u32 %v592, 16
        %v973 = vrot.slane %v971, 4
        %v974 = vor.u32 %v973, %v969
        %v975 = vrot.slane %v974, 4
        %v977 = vshll.u32 %v593, 16
        %v979 = vrot.slane %v977, 5
        %v980 = vsel %vm596, %v975, %v979
        %s981 = scalar_lea.vmem %s1, 4
        %v982 = vld [vmem:[%s981] sm:$0x3]
        %v983 = vunpack.c.l.b16 %v610
        %v984 = vunpack.c.l.b16 %v620
        %v985 = vunpack.c.l.b16 %v634
        %v986 = vunpack.c.l.b16 %v644
        %v987 = vunpack.c.l.b16 %v658
        %v988 = vunpack.c.l.b16 %v668
        %v989 = vunpack.c.l.b16 %v682
        %v990 = vunpack.c.l.b16 %v692
        %v991 = vunpack.c.l.b16 %v706
        %v992 = vunpack.c.l.b16 %v716
        %v993 = vunpack.c.l.b16 %v730
        %v994 = vunpack.c.l.b16 %v740
        %v995 = vunpack.c.l.b16 %v754
        %v996 = vunpack.c.l.b16 %v764
        %v997 = vunpack.c.l.b16 %v778
        %v998 = vunpack.c.l.b16 %v788
        %v999 = vunpack.c.l.b16 %v802
        %v1000 = vunpack.c.l.b16 %v812
        %v1001 = vunpack.c.l.b16 %v826
        %v1002 = vunpack.c.l.b16 %v836
        %v1003 = vunpack.c.l.b16 %v850
        %v1004 = vunpack.c.l.b16 %v860
        %v1005 = vunpack.c.l.b16 %v874
        %v1006 = vunpack.c.l.b16 %v884
        %v1007 = vunpack.c.l.b16 %v898
        %v1008 = vunpack.c.l.b16 %v908
        %v1009 = vunpack.c.l.b16 %v922
        %v1010 = vunpack.c.l.b16 %v932
        %v1011 = vunpack.c.l.b16 %v946
        %v1012 = vunpack.c.l.b16 %v956
        %v1013 = vunpack.c.l.b16 %v970
        %v1014 = vunpack.c.l.b16 %v980
        %v1015 = vpack.c.b16 %v984, %v983
        %v1016 = vpack.c.b16 %v986, %v985
        %v1017 = vpack.c.b16 %v988, %v987
        %v1018 = vpack.c.b16 %v990, %v989
        %v1019 = vpack.c.b16 %v992, %v991
        %v1020 = vpack.c.b16 %v994, %v993
        %v1021 = vpack.c.b16 %v996, %v995
        %v1022 = vpack.c.b16 %v998, %v997
        %v1023 = vpack.c.b16 %v1000, %v999
        %v1024 = vpack.c.b16 %v1002, %v1001
        %v1025 = vpack.c.b16 %v1004, %v1003
        %v1026 = vpack.c.b16 %v1006, %v1005
        %v1027 = vpack.c.b16 %v1008, %v1007
        %v1028 = vpack.c.b16 %v1010, %v1009
        %v1029 = vpack.c.b16 %v1012, %v1011
        %v1030 = vpack.c.b16 %v1014, %v1013
        %v1032 = vsel %vm306, %v1015, 0
        %v1035 = vsel %vm306, %v1016, 0
        %v1038 = vsel %vm306, %v1017, 0
        %v1041 = vsel %vm306, %v1018, 0
        %v1044 = vsel %vm306, %v1019, 0
        %v1047 = vsel %vm306, %v1020, 0
        %v1050 = vsel %vm306, %v1021, 0
        %v1053 = vsel %vm306, %v1022, 0
        %v1056 = vsel %vm306, %v1023, 0
        %v1059 = vsel %vm306, %v1024, 0
        %v1062 = vsel %vm306, %v1025, 0
        %v1065 = vsel %vm306, %v1026, 0
        %v1068 = vsel %vm306, %v1027, 0
        %v1071 = vsel %vm306, %v1028, 0
        %v1074 = vsel %vm306, %v1029, 0
        %v1077 = vsel %vm306, %v1030, 0
        %v1080 = vsel %vm355, %v982, 0
        %1082 = vmatpush.bf16.msra.mxu0 0
        %1083 = vmatpush.bf16.msra.mxu0 0
        %1084 = vmatpush.bf16.msra.mxu0 0
        %1085 = vmatpush.bf16.msra.mxu0 0
        %1086 = vmatpush.bf16.msra.mxu0 0
        %1087 = vmatpush.bf16.msra.mxu0 0
        %1088 = vmatpush.bf16.msra.mxu0 0
        %1089 = vmatpush.bf16.msra.mxu0 %v1080
        %1090 = vmatmul.bf16.gmra.mxu0 %v1032
        %v1091 = vpop.f32.mrf.mxu0
        %v1092 = vadd.f32 0.0, %v1091
        %v1093 = vpop.f32.mrf.mxu0
        %v1094 = vadd.f32 0.0, %v1093
        %1095 = vmatmul.bf16.gmra.mxu0 %v1035
        %v1096 = vpop.f32.mrf.mxu0
        %v1097 = vadd.f32 0.0, %v1096
        %v1098 = vpop.f32.mrf.mxu0
        %v1099 = vadd.f32 0.0, %v1098
        %1100 = vmatmul.bf16.gmra.mxu0 %v1038
        %v1101 = vpop.f32.mrf.mxu0
        %v1102 = vadd.f32 0.0, %v1101
        %v1103 = vpop.f32.mrf.mxu0
        %v1104 = vadd.f32 0.0, %v1103
        %1105 = vmatmul.bf16.gmra.mxu0 %v1041
        %v1106 = vpop.f32.mrf.mxu0
        %v1107 = vadd.f32 0.0, %v1106
        %v1108 = vpop.f32.mrf.mxu0
        %v1109 = vadd.f32 0.0, %v1108
        %1110 = vmatmul.bf16.gmra.mxu0 %v1044
        %v1111 = vpop.f32.mrf.mxu0
        %v1112 = vadd.f32 0.0, %v1111
        %v1113 = vpop.f32.mrf.mxu0
        %v1114 = vadd.f32 0.0, %v1113
        %1115 = vmatmul.bf16.gmra.mxu0 %v1047
        %v1116 = vpop.f32.mrf.mxu0
        %v1117 = vadd.f32 0.0, %v1116
        %v1118 = vpop.f32.mrf.mxu0
        %v1119 = vadd.f32 0.0, %v1118
        %1120 = vmatmul.bf16.gmra.mxu0 %v1050
        %v1121 = vpop.f32.mrf.mxu0
        %v1122 = vadd.f32 0.0, %v1121
        %v1123 = vpop.f32.mrf.mxu0
        %v1124 = vadd.f32 0.0, %v1123
        %1125 = vmatmul.bf16.gmra.mxu0 %v1053
        %v1126 = vpop.f32.mrf.mxu0
        %v1127 = vadd.f32 0.0, %v1126
        %v1128 = vpop.f32.mrf.mxu0
        %v1129 = vadd.f32 0.0, %v1128
        %1130 = vmatmul.bf16.gmra.mxu0 %v1056
        %v1131 = vpop.f32.mrf.mxu0
        %v1132 = vadd.f32 0.0, %v1131
        %v1133 = vpop.f32.mrf.mxu0
        %v1134 = vadd.f32 0.0, %v1133
        %1135 = vmatmul.bf16.gmra.mxu0 %v1059
        %v1136 = vpop.f32.mrf.mxu0
        %v1137 = vadd.f32 0.0, %v1136
        %v1138 = vpop.f32.mrf.mxu0
        %v1139 = vadd.f32 0.0, %v1138
        %1140 = vmatmul.bf16.gmra.mxu0 %v1062
        %v1141 = vpop.f32.mrf.mxu0
        %v1142 = vadd.f32 0.0, %v1141
        %v1143 = vpop.f32.mrf.mxu0
        %v1144 = vadd.f32 0.0, %v1143
        %1145 = vmatmul.bf16.gmra.mxu0 %v1065
        %v1146 = vpop.f32.mrf.mxu0
        %v1147 = vadd.f32 0.0, %v1146
        %v1148 = vpop.f32.mrf.mxu0
        %v1149 = vadd.f32 0.0, %v1148
        %1150 = vmatmul.bf16.gmra.mxu0 %v1068
        %v1151 = vpop.f32.mrf.mxu0
        %v1152 = vadd.f32 0.0, %v1151
        %v1153 = vpop.f32.mrf.mxu0
        %v1154 = vadd.f32 0.0, %v1153
        %1155 = vmatmul.bf16.gmra.mxu0 %v1071
        %v1156 = vpop.f32.mrf.mxu0
        %v1157 = vadd.f32 0.0, %v1156
        %v1158 = vpop.f32.mrf.mxu0
        %v1159 = vadd.f32 0.0, %v1158
        %1160 = vmatmul.bf16.gmra.mxu0 %v1074
        %v1161 = vpop.f32.mrf.mxu0
        %v1162 = vadd.f32 0.0, %v1161
        %v1163 = vpop.f32.mrf.mxu0
        %v1164 = vadd.f32 0.0, %v1163
        %1165 = vmatmul.bf16.gmra.mxu0 %v1077
        %v1166 = vpop.f32.mrf.mxu0
        %v1167 = vadd.f32 0.0, %v1166
        %v1168 = vpop.f32.mrf.mxu0
        %v1169 = vadd.f32 0.0, %v1168
        %1170 = vdwg.mxu0
        %v1172 = vsel %vm355, %v545, 0
        %1174 = vmatpush.bf16.msra.mxu0 0
        %1175 = vmatpush.bf16.msra.mxu0 0
        %1176 = vmatpush.bf16.msra.mxu0 0
        %1177 = vmatpush.bf16.msra.mxu0 0
        %1178 = vmatpush.bf16.msra.mxu0 0
        %1179 = vmatpush.bf16.msra.mxu0 0
        %1180 = vmatpush.bf16.msra.mxu0 0
        %1181 = vmatpush.bf16.msra.mxu0 %v1172
        %1182 = vmatmul.bf16.gmra.mxu0 %v308
        %v1183 = vpop.f32.mrf.mxu0
        %v1184 = vadd.f32 %v1092, %v1183
        %v1185 = vpop.f32.mrf.mxu0
        %v1186 = vadd.f32 %v1094, %v1185
        %1187 = vmatmul.bf16.gmra.mxu0 %v311
        %v1188 = vpop.f32.mrf.mxu0
        %v1189 = vadd.f32 %v1097, %v1188
        %v1190 = vpop.f32.mrf.mxu0
        %v1191 = vadd.f32 %v1099, %v1190
        %1192 = vmatmul.bf16.gmra.mxu0 %v314
        %v1193 = vpop.f32.mrf.mxu0
        %v1194 = vadd.f32 %v1102, %v1193
        %v1195 = vpop.f32.mrf.mxu0
        %v1196 = vadd.f32 %v1104, %v1195
        %1197 = vmatmul.bf16.gmra.mxu0 %v317
        %v1198 = vpop.f32.mrf.mxu0
        %v1199 = vadd.f32 %v1107, %v1198
        %v1200 = vpop.f32.mrf.mxu0
        %v1201 = vadd.f32 %v1109, %v1200
        %1202 = vmatmul.bf16.gmra.mxu0 %v320
        %v1203 = vpop.f32.mrf.mxu0
        %v1204 = vadd.f32 %v1112, %v1203
        %v1205 = vpop.f32.mrf.mxu0
        %v1206 = vadd.f32 %v1114, %v1205
        %1207 = vmatmul.bf16.gmra.mxu0 %v323
        %v1208 = vpop.f32.mrf.mxu0
        %v1209 = vadd.f32 %v1117, %v1208
        %v1210 = vpop.f32.mrf.mxu0
        %v1211 = vadd.f32 %v1119, %v1210
        %1212 = vmatmul.bf16.gmra.mxu0 %v326
        %v1213 = vpop.f32.mrf.mxu0
        %v1214 = vadd.f32 %v1122, %v1213
        %v1215 = vpop.f32.mrf.mxu0
        %v1216 = vadd.f32 %v1124, %v1215
        %1217 = vmatmul.bf16.gmra.mxu0 %v329
        %v1218 = vpop.f32.mrf.mxu0
        %v1219 = vadd.f32 %v1127, %v1218
        %v1220 = vpop.f32.mrf.mxu0
        %v1221 = vadd.f32 %v1129, %v1220
        %1222 = vmatmul.bf16.gmra.mxu0 %v332
        %v1223 = vpop.f32.mrf.mxu0
        %v1224 = vadd.f32 %v1132, %v1223
        %v1225 = vpop.f32.mrf.mxu0
        %v1226 = vadd.f32 %v1134, %v1225
        %1227 = vmatmul.bf16.gmra.mxu0 %v335
        %v1228 = vpop.f32.mrf.mxu0
        %v1229 = vadd.f32 %v1137, %v1228
        %v1230 = vpop.f32.mrf.mxu0
        %v1231 = vadd.f32 %v1139, %v1230
        %1232 = vmatmul.bf16.gmra.mxu0 %v338
        %v1233 = vpop.f32.mrf.mxu0
        %v1234 = vadd.f32 %v1142, %v1233
        %v1235 = vpop.f32.mrf.mxu0
        %v1236 = vadd.f32 %v1144, %v1235
        %1237 = vmatmul.bf16.gmra.mxu0 %v341
        %v1238 = vpop.f32.mrf.mxu0
        %v1239 = vadd.f32 %v1147, %v1238
        %v1240 = vpop.f32.mrf.mxu0
        %v1241 = vadd.f32 %v1149, %v1240
        %1242 = vmatmul.bf16.gmra.mxu0 %v344
        %v1243 = vpop.f32.mrf.mxu0
        %v1244 = vadd.f32 %v1152, %v1243
        %v1245 = vpop.f32.mrf.mxu0
        %v1246 = vadd.f32 %v1154, %v1245
        %1247 = vmatmul.bf16.gmra.mxu0 %v347
        %v1248 = vpop.f32.mrf.mxu0
        %v1249 = vadd.f32 %v1157, %v1248
        %v1250 = vpop.f32.mrf.mxu0
        %v1251 = vadd.f32 %v1159, %v1250
        %1252 = vmatmul.bf16.gmra.mxu0 %v350
        %v1253 = vpop.f32.mrf.mxu0
        %v1254 = vadd.f32 %v1162, %v1253
        %v1255 = vpop.f32.mrf.mxu0
        %v1256 = vadd.f32 %v1164, %v1255
        %1257 = vmatmul.bf16.gmra.mxu0 %v353
        %v1258 = vpop.f32.mrf.mxu0
        %v1259 = vadd.f32 %v1167, %v1258
        %v1260 = vpop.f32.mrf.mxu0
        %v1261 = vadd.f32 %v1169, %v1260
        %1262 = vdwg.mxu0
        %v1263 = vadd.f32 %v1184, %v188
        %v1264 = vadd.f32 %v1186, %v188
        %v1265 = vadd.f32 %v1189, %v188
        %v1266 = vadd.f32 %v1191, %v188
        %v1267 = vadd.f32 %v1194, %v188
        %v1268 = vadd.f32 %v1196, %v188
        %v1269 = vadd.f32 %v1199, %v188
        %v1270 = vadd.f32 %v1201, %v188
        %v1271 = vadd.f32 %v1204, %v188
        %v1272 = vadd.f32 %v1206, %v188
        %v1273 = vadd.f32 %v1209, %v188
        %v1274 = vadd.f32 %v1211, %v188
        %v1275 = vadd.f32 %v1214, %v188
        %v1276 = vadd.f32 %v1216, %v188
        %v1277 = vadd.f32 %v1219, %v188
        %v1278 = vadd.f32 %v1221, %v188
        %v1279 = vadd.f32 %v1224, %v188
        %v1280 = vadd.f32 %v1226, %v188
        %v1281 = vadd.f32 %v1229, %v188
        %v1282 = vadd.f32 %v1231, %v188
        %v1283 = vadd.f32 %v1234, %v188
        %v1284 = vadd.f32 %v1236, %v188
        %v1285 = vadd.f32 %v1239, %v188
        %v1286 = vadd.f32 %v1241, %v188
        %v1287 = vadd.f32 %v1244, %v188
        %v1288 = vadd.f32 %v1246, %v188
        %v1289 = vadd.f32 %v1249, %v188
        %v1290 = vadd.f32 %v1251, %v188
        %v1291 = vadd.f32 %v1254, %v188
        %v1292 = vadd.f32 %v1256, %v188
        %v1293 = vadd.f32 %v1259, %v188
        %v1294 = vadd.f32 %v1261, %v188
        %v1295 = vmax.f32 %v1263, 0.0
        %v1296 = vmax.f32 %v1264, 0.0
        %v1297 = vmax.f32 %v1265, 0.0
        %v1298 = vmax.f32 %v1266, 0.0
        %v1299 = vmax.f32 %v1267, 0.0
        %v1300 = vmax.f32 %v1268, 0.0
        %v1301 = vmax.f32 %v1269, 0.0
        %v1302 = vmax.f32 %v1270, 0.0
        %v1303 = vmax.f32 %v1271, 0.0
        %v1304 = vmax.f32 %v1272, 0.0
        %v1305 = vmax.f32 %v1273, 0.0
        %v1306 = vmax.f32 %v1274, 0.0
        %v1307 = vmax.f32 %v1275, 0.0
        %v1308 = vmax.f32 %v1276, 0.0
        %v1309 = vmax.f32 %v1277, 0.0
        %v1310 = vmax.f32 %v1278, 0.0
        %v1311 = vmax.f32 %v1279, 0.0
        %v1312 = vmax.f32 %v1280, 0.0
        %v1313 = vmax.f32 %v1281, 0.0
        %v1314 = vmax.f32 %v1282, 0.0
        %v1315 = vmax.f32 %v1283, 0.0
        %v1316 = vmax.f32 %v1284, 0.0
        %v1317 = vmax.f32 %v1285, 0.0
        %v1318 = vmax.f32 %v1286, 0.0
        %v1319 = vmax.f32 %v1287, 0.0
        %v1320 = vmax.f32 %v1288, 0.0
        %v1321 = vmax.f32 %v1289, 0.0
        %v1322 = vmax.f32 %v1290, 0.0
        %v1323 = vmax.f32 %v1291, 0.0
        %v1324 = vmax.f32 %v1292, 0.0
        %v1325 = vmax.f32 %v1293, 0.0
        %v1326 = vmax.f32 %v1294, 0.0
        %v1327 = vpack.c.bf16 %v1295, %v1295
        %v1328 = vpack.c.bf16 %v1296, %v1296
        %v1329 = vpack.c.bf16 %v1297, %v1297
        %v1330 = vpack.c.bf16 %v1298, %v1298
        %v1331 = vpack.c.bf16 %v1299, %v1299
        %v1332 = vpack.c.bf16 %v1300, %v1300
        %v1333 = vpack.c.bf16 %v1301, %v1301
        %v1334 = vpack.c.bf16 %v1302, %v1302
        %v1335 = vpack.c.bf16 %v1303, %v1303
        %v1336 = vpack.c.bf16 %v1304, %v1304
        %v1337 = vpack.c.bf16 %v1305, %v1305
        %v1338 = vpack.c.bf16 %v1306, %v1306
        %v1339 = vpack.c.bf16 %v1307, %v1307
        %v1340 = vpack.c.bf16 %v1308, %v1308
        %v1341 = vpack.c.bf16 %v1309, %v1309
        %v1342 = vpack.c.bf16 %v1310, %v1310
        %v1343 = vpack.c.bf16 %v1311, %v1311
        %v1344 = vpack.c.bf16 %v1312, %v1312
        %v1345 = vpack.c.bf16 %v1313, %v1313
        %v1346 = vpack.c.bf16 %v1314, %v1314
        %v1347 = vpack.c.bf16 %v1315, %v1315
        %v1348 = vpack.c.bf16 %v1316, %v1316
        %v1349 = vpack.c.bf16 %v1317, %v1317
        %v1350 = vpack.c.bf16 %v1318, %v1318
        %v1351 = vpack.c.bf16 %v1319, %v1319
        %v1352 = vpack.c.bf16 %v1320, %v1320
        %v1353 = vpack.c.bf16 %v1321, %v1321
        %v1354 = vpack.c.bf16 %v1322, %v1322
        %v1355 = vpack.c.bf16 %v1323, %v1323
        %v1356 = vpack.c.bf16 %v1324, %v1324
        %v1357 = vpack.c.bf16 %v1325, %v1325
        %v1358 = vpack.c.bf16 %v1326, %v1326
        %s1359 = scalar_lea.vmem %s177, 128 [#allocation2]
        %1360 = vst [vmem:[%s1359] sm:$0xf] %v1327
        %1361 = vst [vmem:[%s1359 + $0x4] sm:$0xf] %v1328
        %1362 = vst [vmem:[%s1359 + $0x8] sm:$0xf] %v1329
        %1363 = vst [vmem:[%s1359 + $0xc] sm:$0xf] %v1330
        %1364 = vst [vmem:[%s1359 + $0x10] sm:$0xf] %v1331
        %1365 = vst [vmem:[%s1359 + $0x14] sm:$0xf] %v1332
        %1366 = vst [vmem:[%s1359 + $0x18] sm:$0xf] %v1333
        %1367 = vst [vmem:[%s1359 + $0x1c] sm:$0xf] %v1334
        %1368 = vst [vmem:[%s1359 + $0x20] sm:$0xf] %v1335
        %1369 = vst [vmem:[%s1359 + $0x24] sm:$0xf] %v1336
        %1370 = vst [vmem:[%s1359 + $0x28] sm:$0xf] %v1337
        %1371 = vst [vmem:[%s1359 + $0x2c] sm:$0xf] %v1338
        %1372 = vst [vmem:[%s1359 + $0x30] sm:$0xf] %v1339
        %1373 = vst [vmem:[%s1359 + $0x34] sm:$0xf] %v1340
        %1374 = vst [vmem:[%s1359 + $0x38] sm:$0xf] %v1341
        %1375 = vst [vmem:[%s1359 + $0x3c] sm:$0xf] %v1342
        %1376 = vst [vmem:[%s1359 + $0x40] sm:$0xf] %v1343
        %1377 = vst [vmem:[%s1359 + $0x44] sm:$0xf] %v1344
        %1378 = vst [vmem:[%s1359 + $0x48] sm:$0xf] %v1345
        %1379 = vst [vmem:[%s1359 + $0x4c] sm:$0xf] %v1346
        %1380 = vst [vmem:[%s1359 + $0x50] sm:$0xf] %v1347
        %1381 = vst [vmem:[%s1359 + $0x54] sm:$0xf] %v1348
        %1382 = vst [vmem:[%s1359 + $0x58] sm:$0xf] %v1349
        %1383 = vst [vmem:[%s1359 + $0x5c] sm:$0xf] %v1350
        %1384 = vst [vmem:[%s1359 + $0x60] sm:$0xf] %v1351
        %1385 = vst [vmem:[%s1359 + $0x64] sm:$0xf] %v1352
        %1386 = vst [vmem:[%s1359 + $0x68] sm:$0xf] %v1353
        %1387 = vst [vmem:[%s1359 + $0x6c] sm:$0xf] %v1354
        %1388 = vst [vmem:[%s1359 + $0x70] sm:$0xf] %v1355
        %1389 = vst [vmem:[%s1359 + $0x74] sm:$0xf] %v1356
        %1390 = vst [vmem:[%s1359 + $0x78] sm:$0xf] %v1357
        %1391 = vst [vmem:[%s1359 + $0x7c] sm:$0xf] %v1358
        %s1392 = scalar_lea.vmem %s1, 6
        %v1393 = vld [vmem:[%s1392] sm:$0x3]
        %s1394 = sadd.s32 %s185, 1
        %s1395 = smul.u32 %s1394, 3
        %s1396 = smul.addr %s1395, 4
        %s1397 = scalar_lea.vmem %s182, %s1396
        %v1398 = vld [vmem:[%s1397] sm:$0xf]
        %v1399 = vld [vmem:[%s1397 + $0x4] sm:$0xf]
        %v1400 = vld [vmem:[%s1397 + $0xc] sm:$0xf]
        %v1401 = vld [vmem:[%s1397 + $0x10] sm:$0xf]
        %v1402 = vld [vmem:[%s1397 + $0x18] sm:$0xf]
        %v1403 = vld [vmem:[%s1397 + $0x1c] sm:$0xf]
        %v1404 = vld [vmem:[%s1397 + $0x24] sm:$0xf]
        %v1405 = vld [vmem:[%s1397 + $0x28] sm:$0xf]
        %v1406 = vld [vmem:[%s1397 + $0x30] sm:$0xf]
        %v1407 = vld [vmem:[%s1397 + $0x34] sm:$0xf]
        %v1408 = vld [vmem:[%s1397 + $0x3c] sm:$0xf]
        %v1409 = vld [vmem:[%s1397 + $0x40] sm:$0xf]
        %v1410 = vld [vmem:[%s1397 + $0x48] sm:$0xf]
        %v1411 = vld [vmem:[%s1397 + $0x4c] sm:$0xf]
        %v1412 = vld [vmem:[%s1397 + $0x54] sm:$0xf]
        %v1413 = vld [vmem:[%s1397 + $0x58] sm:$0xf]
        %v1414 = vld [vmem:[%s1397 + $0x60] sm:$0xf]
        %v1415 = vld [vmem:[%s1397 + $0x64] sm:$0xf]
        %v1416 = vld [vmem:[%s1397 + $0x6c] sm:$0xf]
        %v1417 = vld [vmem:[%s1397 + $0x70] sm:$0xf]
        %v1418 = vld [vmem:[%s1397 + $0x78] sm:$0xf]
        %v1419 = vld [vmem:[%s1397 + $0x7c] sm:$0xf]
        %v1420 = vld [vmem:[%s1397 + $0x84] sm:$0xf]
        %v1421 = vld [vmem:[%s1397 + $0x88] sm:$0xf]
        %v1422 = vld [vmem:[%s1397 + $0x90] sm:$0xf]
        %v1423 = vld [vmem:[%s1397 + $0x94] sm:$0xf]
        %v1424 = vld [vmem:[%s1397 + $0x9c] sm:$0xf]
        %v1425 = vld [vmem:[%s1397 + $0xa0] sm:$0xf]
        %v1426 = vld [vmem:[%s1397 + $0xa8] sm:$0xf]
        %v1427 = vld [vmem:[%s1397 + $0xac] sm:$0xf]
        %v1428 = vld [vmem:[%s1397 + $0xb4] sm:$0xf]
        %v1429 = vld [vmem:[%s1397 + $0xb8] sm:$0xf]
        %s1430 = scalar_lea.vmem %s1, 8
        %v1431 = vld [vmem:[%s1430] sm:$0x3]
        %v1464 = vunpack.c.l.b16 %v1398
        %v1465 = vunpack.c.l.b16 %v1399
        %v1466 = vunpack.c.l.b16 %v1400
        %v1467 = vunpack.c.l.b16 %v1401
        %v1468 = vunpack.c.l.b16 %v1402
        %v1469 = vunpack.c.l.b16 %v1403
        %v1470 = vunpack.c.l.b16 %v1404
        %v1471 = vunpack.c.l.b16 %v1405
        %v1472 = vunpack.c.l.b16 %v1406
        %v1473 = vunpack.c.l.b16 %v1407
        %v1474 = vunpack.c.l.b16 %v1408
        %v1475 = vunpack.c.l.b16 %v1409
        %v1476 = vunpack.c.l.b16 %v1410
        %v1477 = vunpack.c.l.b16 %v1411
        %v1478 = vunpack.c.l.b16 %v1412
        %v1479 = vunpack.c.l.b16 %v1413
        %v1480 = vunpack.c.l.b16 %v1414
        %v1481 = vunpack.c.l.b16 %v1415
        %v1482 = vunpack.c.l.b16 %v1416
        %v1483 = vunpack.c.l.b16 %v1417
        %v1484 = vunpack.c.l.b16 %v1418
        %v1485 = vunpack.c.l.b16 %v1419
        %v1486 = vunpack.c.l.b16 %v1420
        %v1487 = vunpack.c.l.b16 %v1421
        %v1488 = vunpack.c.l.b16 %v1422
        %v1489 = vunpack.c.l.b16 %v1423
        %v1490 = vunpack.c.l.b16 %v1424
        %v1491 = vunpack.c.l.b16 %v1425
        %v1492 = vunpack.c.l.b16 %v1426
        %v1493 = vunpack.c.l.b16 %v1427
        %v1494 = vunpack.c.l.b16 %v1428
        %v1495 = vunpack.c.l.b16 %v1429
        %v1496 = vpack.c.b16 %v1465, %v1464
        %v1497 = vpack.c.b16 %v1467, %v1466
        %v1498 = vpack.c.b16 %v1469, %v1468
        %v1499 = vpack.c.b16 %v1471, %v1470
        %v1500 = vpack.c.b16 %v1473, %v1472
        %v1501 = vpack.c.b16 %v1475, %v1474
        %v1502 = vpack.c.b16 %v1477, %v1476
        %v1503 = vpack.c.b16 %v1479, %v1478
        %v1504 = vpack.c.b16 %v1481, %v1480
        %v1505 = vpack.c.b16 %v1483, %v1482
        %v1506 = vpack.c.b16 %v1485, %v1484
        %v1507 = vpack.c.b16 %v1487, %v1486
        %v1508 = vpack.c.b16 %v1489, %v1488
        %v1509 = vpack.c.b16 %v1491, %v1490
        %v1510 = vpack.c.b16 %v1493, %v1492
        %v1511 = vpack.c.b16 %v1495, %v1494
        %v1513 = vsel %vm306, %v1496, 0
        %v1516 = vsel %vm306, %v1497, 0
        %v1519 = vsel %vm306, %v1498, 0
        %v1522 = vsel %vm306, %v1499, 0
        %v1525 = vsel %vm306, %v1500, 0
        %v1528 = vsel %vm306, %v1501, 0
        %v1531 = vsel %vm306, %v1502, 0
        %v1534 = vsel %vm306, %v1503, 0
        %v1537 = vsel %vm306, %v1504, 0
        %v1540 = vsel %vm306, %v1505, 0
        %v1543 = vsel %vm306, %v1506, 0
        %v1546 = vsel %vm306, %v1507, 0
        %v1549 = vsel %vm306, %v1508, 0
        %v1552 = vsel %vm306, %v1509, 0
        %v1555 = vsel %vm306, %v1510, 0
        %v1558 = vsel %vm306, %v1511, 0
        %v1561 = vsel %vm355, %v1431, 0
        %1563 = vmatpush.bf16.msra.mxu0 0
        %1564 = vmatpush.bf16.msra.mxu0 0
        %1565 = vmatpush.bf16.msra.mxu0 0
        %1566 = vmatpush.bf16.msra.mxu0 0
        %1567 = vmatpush.bf16.msra.mxu0 0
        %1568 = vmatpush.bf16.msra.mxu0 0
        %1569 = vmatpush.bf16.msra.mxu0 0
        %1570 = vmatpush.bf16.msra.mxu0 %v1561
        %1571 = vmatmul.bf16.gmra.mxu0 %v1513
        %v1572 = vpop.f32.mrf.mxu0
        %v1573 = vadd.f32 0.0, %v1572
        %v1574 = vpop.f32.mrf.mxu0
        %v1575 = vadd.f32 0.0, %v1574
        %1576 = vmatmul.bf16.gmra.mxu0 %v1516
        %v1577 = vpop.f32.mrf.mxu0
        %v1578 = vadd.f32 0.0, %v1577
        %v1579 = vpop.f32.mrf.mxu0
        %v1580 = vadd.f32 0.0, %v1579
        %1581 = vmatmul.bf16.gmra.mxu0 %v1519
        %v1582 = vpop.f32.mrf.mxu0
        %v1583 = vadd.f32 0.0, %v1582
        %v1584 = vpop.f32.mrf.mxu0
        %v1585 = vadd.f32 0.0, %v1584
        %1586 = vmatmul.bf16.gmra.mxu0 %v1522
        %v1587 = vpop.f32.mrf.mxu0
        %v1588 = vadd.f32 0.0, %v1587
        %v1589 = vpop.f32.mrf.mxu0
        %v1590 = vadd.f32 0.0, %v1589
        %1591 = vmatmul.bf16.gmra.mxu0 %v1525
        %v1592 = vpop.f32.mrf.mxu0
        %v1593 = vadd.f32 0.0, %v1592
        %v1594 = vpop.f32.mrf.mxu0
        %v1595 = vadd.f32 0.0, %v1594
        %1596 = vmatmul.bf16.gmra.mxu0 %v1528
        %v1597 = vpop.f32.mrf.mxu0
        %v1598 = vadd.f32 0.0, %v1597
        %v1599 = vpop.f32.mrf.mxu0
        %v1600 = vadd.f32 0.0, %v1599
        %1601 = vmatmul.bf16.gmra.mxu0 %v1531
        %v1602 = vpop.f32.mrf.mxu0
        %v1603 = vadd.f32 0.0, %v1602
        %v1604 = vpop.f32.mrf.mxu0
        %v1605 = vadd.f32 0.0, %v1604
        %1606 = vmatmul.bf16.gmra.mxu0 %v1534
        %v1607 = vpop.f32.mrf.mxu0
        %v1608 = vadd.f32 0.0, %v1607
        %v1609 = vpop.f32.mrf.mxu0
        %v1610 = vadd.f32 0.0, %v1609
        %1611 = vmatmul.bf16.gmra.mxu0 %v1537
        %v1612 = vpop.f32.mrf.mxu0
        %v1613 = vadd.f32 0.0, %v1612
        %v1614 = vpop.f32.mrf.mxu0
        %v1615 = vadd.f32 0.0, %v1614
        %1616 = vmatmul.bf16.gmra.mxu0 %v1540
        %v1617 = vpop.f32.mrf.mxu0
        %v1618 = vadd.f32 0.0, %v1617
        %v1619 = vpop.f32.mrf.mxu0
        %v1620 = vadd.f32 0.0, %v1619
        %1621 = vmatmul.bf16.gmra.mxu0 %v1543
        %v1622 = vpop.f32.mrf.mxu0
        %v1623 = vadd.f32 0.0, %v1622
        %v1624 = vpop.f32.mrf.mxu0
        %v1625 = vadd.f32 0.0, %v1624
        %1626 = vmatmul.bf16.gmra.mxu0 %v1546
        %v1627 = vpop.f32.mrf.mxu0
        %v1628 = vadd.f32 0.0, %v1627
        %v1629 = vpop.f32.mrf.mxu0
        %v1630 = vadd.f32 0.0, %v1629
        %1631 = vmatmul.bf16.gmra.mxu0 %v1549
        %v1632 = vpop.f32.mrf.mxu0
        %v1633 = vadd.f32 0.0, %v1632
        %v1634 = vpop.f32.mrf.mxu0
        %v1635 = vadd.f32 0.0, %v1634
        %1636 = vmatmul.bf16.gmra.mxu0 %v1552
        %v1637 = vpop.f32.mrf.mxu0
        %v1638 = vadd.f32 0.0, %v1637
        %v1639 = vpop.f32.mrf.mxu0
        %v1640 = vadd.f32 0.0, %v1639
        %1641 = vmatmul.bf16.gmra.mxu0 %v1555
        %v1642 = vpop.f32.mrf.mxu0
        %v1643 = vadd.f32 0.0, %v1642
        %v1644 = vpop.f32.mrf.mxu0
        %v1645 = vadd.f32 0.0, %v1644
        %1646 = vmatmul.bf16.gmra.mxu0 %v1558
        %v1647 = vpop.f32.mrf.mxu0
        %v1648 = vadd.f32 0.0, %v1647
        %v1649 = vpop.f32.mrf.mxu0
        %v1650 = vadd.f32 0.0, %v1649
        %1651 = vdwg.mxu0
        %v1653 = vsel %vm355, %v1393, 0
        %1655 = vmatpush.bf16.msra.mxu0 0
        %1656 = vmatpush.bf16.msra.mxu0 0
        %1657 = vmatpush.bf16.msra.mxu0 0
        %1658 = vmatpush.bf16.msra.mxu0 0
        %1659 = vmatpush.bf16.msra.mxu0 0
        %1660 = vmatpush.bf16.msra.mxu0 0
        %1661 = vmatpush.bf16.msra.mxu0 0
        %1662 = vmatpush.bf16.msra.mxu0 %v1653
        %1663 = vmatmul.bf16.gmra.mxu0 %v308
        %v1664 = vpop.f32.mrf.mxu0
        %v1665 = vadd.f32 %v1573, %v1664
        %v1666 = vpop.f32.mrf.mxu0
        %v1667 = vadd.f32 %v1575, %v1666
        %1668 = vmatmul.bf16.gmra.mxu0 %v311
        %v1669 = vpop.f32.mrf.mxu0
        %v1670 = vadd.f32 %v1578, %v1669
        %v1671 = vpop.f32.mrf.mxu0
        %v1672 = vadd.f32 %v1580, %v1671
        %1673 = vmatmul.bf16.gmra.mxu0 %v314
        %v1674 = vpop.f32.mrf.mxu0
        %v1675 = vadd.f32 %v1583, %v1674
        %v1676 = vpop.f32.mrf.mxu0
        %v1677 = vadd.f32 %v1585, %v1676
        %1678 = vmatmul.bf16.gmra.mxu0 %v317
        %v1679 = vpop.f32.mrf.mxu0
        %v1680 = vadd.f32 %v1588, %v1679
        %v1681 = vpop.f32.mrf.mxu0
        %v1682 = vadd.f32 %v1590, %v1681
        %1683 = vmatmul.bf16.gmra.mxu0 %v320
        %v1684 = vpop.f32.mrf.mxu0
        %v1685 = vadd.f32 %v1593, %v1684
        %v1686 = vpop.f32.mrf.mxu0
        %v1687 = vadd.f32 %v1595, %v1686
        %1688 = vmatmul.bf16.gmra.mxu0 %v323
        %v1689 = vpop.f32.mrf.mxu0
        %v1690 = vadd.f32 %v1598, %v1689
        %v1691 = vpop.f32.mrf.mxu0
        %v1692 = vadd.f32 %v1600, %v1691
        %1693 = vmatmul.bf16.gmra.mxu0 %v326
        %v1694 = vpop.f32.mrf.mxu0
        %v1695 = vadd.f32 %v1603, %v1694
        %v1696 = vpop.f32.mrf.mxu0
        %v1697 = vadd.f32 %v1605, %v1696
        %1698 = vmatmul.bf16.gmra.mxu0 %v329
        %v1699 = vpop.f32.mrf.mxu0
        %v1700 = vadd.f32 %v1608, %v1699
        %v1701 = vpop.f32.mrf.mxu0
        %v1702 = vadd.f32 %v1610, %v1701
        %1703 = vmatmul.bf16.gmra.mxu0 %v332
        %v1704 = vpop.f32.mrf.mxu0
        %v1705 = vadd.f32 %v1613, %v1704
        %v1706 = vpop.f32.mrf.mxu0
        %v1707 = vadd.f32 %v1615, %v1706
        %1708 = vmatmul.bf16.gmra.mxu0 %v335
        %v1709 = vpop.f32.mrf.mxu0
        %v1710 = vadd.f32 %v1618, %v1709
        %v1711 = vpop.f32.mrf.mxu0
        %v1712 = vadd.f32 %v1620, %v1711
        %1713 = vmatmul.bf16.gmra.mxu0 %v338
        %v1714 = vpop.f32.mrf.mxu0
        %v1715 = vadd.f32 %v1623, %v1714
        %v1716 = vpop.f32.mrf.mxu0
        %v1717 = vadd.f32 %v1625, %v1716
        %1718 = vmatmul.bf16.gmra.mxu0 %v341
        %v1719 = vpop.f32.mrf.mxu0
        %v1720 = vadd.f32 %v1628, %v1719
        %v1721 = vpop.f32.mrf.mxu0
        %v1722 = vadd.f32 %v1630, %v1721
        %1723 = vmatmul.bf16.gmra.mxu0 %v344
        %v1724 = vpop.f32.mrf.mxu0
        %v1725 = vadd.f32 %v1633, %v1724
        %v1726 = vpop.f32.mrf.mxu0
        %v1727 = vadd.f32 %v1635, %v1726
        %1728 = vmatmul.bf16.gmra.mxu0 %v347
        %v1729 = vpop.f32.mrf.mxu0
        %v1730 = vadd.f32 %v1638, %v1729
        %v1731 = vpop.f32.mrf.mxu0
        %v1732 = vadd.f32 %v1640, %v1731
        %1733 = vmatmul.bf16.gmra.mxu0 %v350
        %v1734 = vpop.f32.mrf.mxu0
        %v1735 = vadd.f32 %v1643, %v1734
        %v1736 = vpop.f32.mrf.mxu0
        %v1737 = vadd.f32 %v1645, %v1736
        %1738 = vmatmul.bf16.gmra.mxu0 %v353
        %v1739 = vpop.f32.mrf.mxu0
        %v1740 = vadd.f32 %v1648, %v1739
        %v1741 = vpop.f32.mrf.mxu0
        %v1742 = vadd.f32 %v1650, %v1741
        %1743 = vdwg.mxu0
        %v1744 = vadd.f32 %v1665, %v188
        %v1745 = vadd.f32 %v1667, %v188
        %v1746 = vadd.f32 %v1670, %v188
        %v1747 = vadd.f32 %v1672, %v188
        %v1748 = vadd.f32 %v1675, %v188
        %v1749 = vadd.f32 %v1677, %v188
        %v1750 = vadd.f32 %v1680, %v188
        %v1751 = vadd.f32 %v1682, %v188
        %v1752 = vadd.f32 %v1685, %v188
        %v1753 = vadd.f32 %v1687, %v188
        %v1754 = vadd.f32 %v1690, %v188
        %v1755 = vadd.f32 %v1692, %v188
        %v1756 = vadd.f32 %v1695, %v188
        %v1757 = vadd.f32 %v1697, %v188
        %v1758 = vadd.f32 %v1700, %v188
        %v1759 = vadd.f32 %v1702, %v188
        %v1760 = vadd.f32 %v1705, %v188
        %v1761 = vadd.f32 %v1707, %v188
        %v1762 = vadd.f32 %v1710, %v188
        %v1763 = vadd.f32 %v1712, %v188
        %v1764 = vadd.f32 %v1715, %v188
        %v1765 = vadd.f32 %v1717, %v188
        %v1766 = vadd.f32 %v1720, %v188
        %v1767 = vadd.f32 %v1722, %v188
        %v1768 = vadd.f32 %v1725, %v188
        %v1769 = vadd.f32 %v1727, %v188
        %v1770 = vadd.f32 %v1730, %v188
        %v1771 = vadd.f32 %v1732, %v188
        %v1772 = vadd.f32 %v1735, %v188
        %v1773 = vadd.f32 %v1737, %v188
        %v1774 = vadd.f32 %v1740, %v188
        %v1775 = vadd.f32 %v1742, %v188
        %v1776 = vmax.f32 %v1744, 0.0
        %v1777 = vmax.f32 %v1745, 0.0
        %v1778 = vmax.f32 %v1746, 0.0
        %v1779 = vmax.f32 %v1747, 0.0
        %v1780 = vmax.f32 %v1748, 0.0
        %v1781 = vmax.f32 %v1749, 0.0
        %v1782 = vmax.f32 %v1750, 0.0
        %v1783 = vmax.f32 %v1751, 0.0
        %v1784 = vmax.f32 %v1752, 0.0
        %v1785 = vmax.f32 %v1753, 0.0
        %v1786 = vmax.f32 %v1754, 0.0
        %v1787 = vmax.f32 %v1755, 0.0
        %v1788 = vmax.f32 %v1756, 0.0
        %v1789 = vmax.f32 %v1757, 0.0
        %v1790 = vmax.f32 %v1758, 0.0
        %v1791 = vmax.f32 %v1759, 0.0
        %v1792 = vmax.f32 %v1760, 0.0
        %v1793 = vmax.f32 %v1761, 0.0
        %v1794 = vmax.f32 %v1762, 0.0
        %v1795 = vmax.f32 %v1763, 0.0
        %v1796 = vmax.f32 %v1764, 0.0
        %v1797 = vmax.f32 %v1765, 0.0
        %v1798 = vmax.f32 %v1766, 0.0
        %v1799 = vmax.f32 %v1767, 0.0
        %v1800 = vmax.f32 %v1768, 0.0
        %v1801 = vmax.f32 %v1769, 0.0
        %v1802 = vmax.f32 %v1770, 0.0
        %v1803 = vmax.f32 %v1771, 0.0
        %v1804 = vmax.f32 %v1772, 0.0
        %v1805 = vmax.f32 %v1773, 0.0
        %v1806 = vmax.f32 %v1774, 0.0
        %v1807 = vmax.f32 %v1775, 0.0
        %v1808 = vpack.c.bf16 %v1776, %v1776
        %v1809 = vpack.c.bf16 %v1777, %v1777
        %v1810 = vpack.c.bf16 %v1778, %v1778
        %v1811 = vpack.c.bf16 %v1779, %v1779
        %v1812 = vpack.c.bf16 %v1780, %v1780
        %v1813 = vpack.c.bf16 %v1781, %v1781
        %v1814 = vpack.c.bf16 %v1782, %v1782
        %v1815 = vpack.c.bf16 %v1783, %v1783
        %v1816 = vpack.c.bf16 %v1784, %v1784
        %v1817 = vpack.c.bf16 %v1785, %v1785
        %v1818 = vpack.c.bf16 %v1786, %v1786
        %v1819 = vpack.c.bf16 %v1787, %v1787
        %v1820 = vpack.c.bf16 %v1788, %v1788
        %v1821 = vpack.c.bf16 %v1789, %v1789
        %v1822 = vpack.c.bf16 %v1790, %v1790
        %v1823 = vpack.c.bf16 %v1791, %v1791
        %v1824 = vpack.c.bf16 %v1792, %v1792
        %v1825 = vpack.c.bf16 %v1793, %v1793
        %v1826 = vpack.c.bf16 %v1794, %v1794
        %v1827 = vpack.c.bf16 %v1795, %v1795
        %v1828 = vpack.c.bf16 %v1796, %v1796
        %v1829 = vpack.c.bf16 %v1797, %v1797
        %v1830 = vpack.c.bf16 %v1798, %v1798
        %v1831 = vpack.c.bf16 %v1799, %v1799
        %v1832 = vpack.c.bf16 %v1800, %v1800
        %v1833 = vpack.c.bf16 %v1801, %v1801
        %v1834 = vpack.c.bf16 %v1802, %v1802
        %v1835 = vpack.c.bf16 %v1803, %v1803
        %v1836 = vpack.c.bf16 %v1804, %v1804
        %v1837 = vpack.c.bf16 %v1805, %v1805
        %v1838 = vpack.c.bf16 %v1806, %v1806
        %v1839 = vpack.c.bf16 %v1807, %v1807
        %s1840 = scalar_lea.vmem %s177, 256 [#allocation2]
        %1841 = vst [vmem:[%s1840] sm:$0xf] %v1808
        %1842 = vst [vmem:[%s1840 + $0x4] sm:$0xf] %v1809
        %1843 = vst [vmem:[%s1840 + $0x8] sm:$0xf] %v1810
        %1844 = vst [vmem:[%s1840 + $0xc] sm:$0xf] %v1811
        %1845 = vst [vmem:[%s1840 + $0x10] sm:$0xf] %v1812
        %1846 = vst [vmem:[%s1840 + $0x14] sm:$0xf] %v1813
        %1847 = vst [vmem:[%s1840 + $0x18] sm:$0xf] %v1814
        %1848 = vst [vmem:[%s1840 + $0x1c] sm:$0xf] %v1815
        %1849 = vst [vmem:[%s1840 + $0x20] sm:$0xf] %v1816
        %1850 = vst [vmem:[%s1840 + $0x24] sm:$0xf] %v1817
        %1851 = vst [vmem:[%s1840 + $0x28] sm:$0xf] %v1818
        %1852 = vst [vmem:[%s1840 + $0x2c] sm:$0xf] %v1819
        %1853 = vst [vmem:[%s1840 + $0x30] sm:$0xf] %v1820
        %1854 = vst [vmem:[%s1840 + $0x34] sm:$0xf] %v1821
        %1855 = vst [vmem:[%s1840 + $0x38] sm:$0xf] %v1822
        %1856 = vst [vmem:[%s1840 + $0x3c] sm:$0xf] %v1823
        %1857 = vst [vmem:[%s1840 + $0x40] sm:$0xf] %v1824
        %1858 = vst [vmem:[%s1840 + $0x44] sm:$0xf] %v1825
        %1859 = vst [vmem:[%s1840 + $0x48] sm:$0xf] %v1826
        %1860 = vst [vmem:[%s1840 + $0x4c] sm:$0xf] %v1827
        %1861 = vst [vmem:[%s1840 + $0x50] sm:$0xf] %v1828
        %1862 = vst [vmem:[%s1840 + $0x54] sm:$0xf] %v1829
        %1863 = vst [vmem:[%s1840 + $0x58] sm:$0xf] %v1830
        %1864 = vst [vmem:[%s1840 + $0x5c] sm:$0xf] %v1831
        %1865 = vst [vmem:[%s1840 + $0x60] sm:$0xf] %v1832
        %1866 = vst [vmem:[%s1840 + $0x64] sm:$0xf] %v1833
        %1867 = vst [vmem:[%s1840 + $0x68] sm:$0xf] %v1834
        %1868 = vst [vmem:[%s1840 + $0x6c] sm:$0xf] %v1835
        %1869 = vst [vmem:[%s1840 + $0x70] sm:$0xf] %v1836
        %1870 = vst [vmem:[%s1840 + $0x74] sm:$0xf] %v1837
        %1871 = vst [vmem:[%s1840 + $0x78] sm:$0xf] %v1838
        %1872 = vst [vmem:[%s1840 + $0x7c] sm:$0xf] %v1839
        %s1873 = scalar_lea.vmem %s1, 10
        %v1874 = vld [vmem:[%s1873] sm:$0x3]
        %s1875 = scalar_lea.vmem %s1, 12
        %v1876 = vld [vmem:[%s1875] sm:$0x3]
        %v1878 = vsel %vm355, %v1876, 0
        %1880 = vmatpush.bf16.msra.mxu0 0
        %1881 = vmatpush.bf16.msra.mxu0 0
        %1882 = vmatpush.bf16.msra.mxu0 0
        %1883 = vmatpush.bf16.msra.mxu0 0
        %1884 = vmatpush.bf16.msra.mxu0 0
        %1885 = vmatpush.bf16.msra.mxu0 0
        %1886 = vmatpush.bf16.msra.mxu0 0
        %1887 = vmatpush.bf16.msra.mxu0 %v1878
        %1888 = vmatmul.bf16.gmra.mxu0 %v1032
        %v1889 = vpop.f32.mrf.mxu0
        %v1890 = vadd.f32 0.0, %v1889
        %v1891 = vpop.f32.mrf.mxu0
        %v1892 = vadd.f32 0.0, %v1891
        %1893 = vmatmul.bf16.gmra.mxu0 %v1035
        %v1894 = vpop.f32.mrf.mxu0
        %v1895 = vadd.f32 0.0, %v1894
        %v1896 = vpop.f32.mrf.mxu0
        %v1897 = vadd.f32 0.0, %v1896
        %1898 = vmatmul.bf16.gmra.mxu0 %v1038
        %v1899 = vpop.f32.mrf.mxu0
        %v1900 = vadd.f32 0.0, %v1899
        %v1901 = vpop.f32.mrf.mxu0
        %v1902 = vadd.f32 0.0, %v1901
        %1903 = vmatmul.bf16.gmra.mxu0 %v1041
        %v1904 = vpop.f32.mrf.mxu0
        %v1905 = vadd.f32 0.0, %v1904
        %v1906 = vpop.f32.mrf.mxu0
        %v1907 = vadd.f32 0.0, %v1906
        %1908 = vmatmul.bf16.gmra.mxu0 %v1044
        %v1909 = vpop.f32.mrf.mxu0
        %v1910 = vadd.f32 0.0, %v1909
        %v1911 = vpop.f32.mrf.mxu0
        %v1912 = vadd.f32 0.0, %v1911
        %1913 = vmatmul.bf16.gmra.mxu0 %v1047
        %v1914 = vpop.f32.mrf.mxu0
        %v1915 = vadd.f32 0.0, %v1914
        %v1916 = vpop.f32.mrf.mxu0
        %v1917 = vadd.f32 0.0, %v1916
        %1918 = vmatmul.bf16.gmra.mxu0 %v1050
        %v1919 = vpop.f32.mrf.mxu0
        %v1920 = vadd.f32 0.0, %v1919
        %v1921 = vpop.f32.mrf.mxu0
        %v1922 = vadd.f32 0.0, %v1921
        %1923 = vmatmul.bf16.gmra.mxu0 %v1053
        %v1924 = vpop.f32.mrf.mxu0
        %v1925 = vadd.f32 0.0, %v1924
        %v1926 = vpop.f32.mrf.mxu0
        %v1927 = vadd.f32 0.0, %v1926
        %1928 = vmatmul.bf16.gmra.mxu0 %v1056
        %v1929 = vpop.f32.mrf.mxu0
        %v1930 = vadd.f32 0.0, %v1929
        %v1931 = vpop.f32.mrf.mxu0
        %v1932 = vadd.f32 0.0, %v1931
        %1933 = vmatmul.bf16.gmra.mxu0 %v1059
        %v1934 = vpop.f32.mrf.mxu0
        %v1935 = vadd.f32 0.0, %v1934
        %v1936 = vpop.f32.mrf.mxu0
        %v1937 = vadd.f32 0.0, %v1936
        %1938 = vmatmul.bf16.gmra.mxu0 %v1062
        %v1939 = vpop.f32.mrf.mxu0
        %v1940 = vadd.f32 0.0, %v1939
        %v1941 = vpop.f32.mrf.mxu0
        %v1942 = vadd.f32 0.0, %v1941
        %1943 = vmatmul.bf16.gmra.mxu0 %v1065
        %v1944 = vpop.f32.mrf.mxu0
        %v1945 = vadd.f32 0.0, %v1944
        %v1946 = vpop.f32.mrf.mxu0
        %v1947 = vadd.f32 0.0, %v1946
        %1948 = vmatmul.bf16.gmra.mxu0 %v1068
        %v1949 = vpop.f32.mrf.mxu0
        %v1950 = vadd.f32 0.0, %v1949
        %v1951 = vpop.f32.mrf.mxu0
        %v1952 = vadd.f32 0.0, %v1951
        %1953 = vmatmul.bf16.gmra.mxu0 %v1071
        %v1954 = vpop.f32.mrf.mxu0
        %v1955 = vadd.f32 0.0, %v1954
        %v1956 = vpop.f32.mrf.mxu0
        %v1957 = vadd.f32 0.0, %v1956
        %1958 = vmatmul.bf16.gmra.mxu0 %v1074
        %v1959 = vpop.f32.mrf.mxu0
        %v1960 = vadd.f32 0.0, %v1959
        %v1961 = vpop.f32.mrf.mxu0
        %v1962 = vadd.f32 0.0, %v1961
        %1963 = vmatmul.bf16.gmra.mxu0 %v1077
        %v1964 = vpop.f32.mrf.mxu0
        %v1965 = vadd.f32 0.0, %v1964
        %v1966 = vpop.f32.mrf.mxu0
        %v1967 = vadd.f32 0.0, %v1966
        %1968 = vdwg.mxu0
        %v1970 = vsel %vm355, %v1874, 0
        %1972 = vmatpush.bf16.msra.mxu0 0
        %1973 = vmatpush.bf16.msra.mxu0 0
        %1974 = vmatpush.bf16.msra.mxu0 0
        %1975 = vmatpush.bf16.msra.mxu0 0
        %1976 = vmatpush.bf16.msra.mxu0 0
        %1977 = vmatpush.bf16.msra.mxu0 0
        %1978 = vmatpush.bf16.msra.mxu0 0
        %1979 = vmatpush.bf16.msra.mxu0 %v1970
        %1980 = vmatmul.bf16.gmra.mxu0 %v308
        %v1981 = vpop.f32.mrf.mxu0
        %v1982 = vadd.f32 %v1890, %v1981
        %v1983 = vpop.f32.mrf.mxu0
        %v1984 = vadd.f32 %v1892, %v1983
        %1985 = vmatmul.bf16.gmra.mxu0 %v311
        %v1986 = vpop.f32.mrf.mxu0
        %v1987 = vadd.f32 %v1895, %v1986
        %v1988 = vpop.f32.mrf.mxu0
        %v1989 = vadd.f32 %v1897, %v1988
        %1990 = vmatmul.bf16.gmra.mxu0 %v314
        %v1991 = vpop.f32.mrf.mxu0
        %v1992 = vadd.f32 %v1900, %v1991
        %v1993 = vpop.f32.mrf.mxu0
        %v1994 = vadd.f32 %v1902, %v1993
        %1995 = vmatmul.bf16.gmra.mxu0 %v317
        %v1996 = vpop.f32.mrf.mxu0
        %v1997 = vadd.f32 %v1905, %v1996
        %v1998 = vpop.f32.mrf.mxu0
        %v1999 = vadd.f32 %v1907, %v1998
        %2000 = vmatmul.bf16.gmra.mxu0 %v320
        %v2001 = vpop.f32.mrf.mxu0
        %v2002 = vadd.f32 %v1910, %v2001
        %v2003 = vpop.f32.mrf.mxu0
        %v2004 = vadd.f32 %v1912, %v2003
        %2005 = vmatmul.bf16.gmra.mxu0 %v323
        %v2006 = vpop.f32.mrf.mxu0
        %v2007 = vadd.f32 %v1915, %v2006
        %v2008 = vpop.f32.mrf.mxu0
        %v2009 = vadd.f32 %v1917, %v2008
        %2010 = vmatmul.bf16.gmra.mxu0 %v326
        %v2011 = vpop.f32.mrf.mxu0
        %v2012 = vadd.f32 %v1920, %v2011
        %v2013 = vpop.f32.mrf.mxu0
        %v2014 = vadd.f32 %v1922, %v2013
        %2015 = vmatmul.bf16.gmra.mxu0 %v329
        %v2016 = vpop.f32.mrf.mxu0
        %v2017 = vadd.f32 %v1925, %v2016
        %v2018 = vpop.f32.mrf.mxu0
        %v2019 = vadd.f32 %v1927, %v2018
        %2020 = vmatmul.bf16.gmra.mxu0 %v332
        %v2021 = vpop.f32.mrf.mxu0
        %v2022 = vadd.f32 %v1930, %v2021
        %v2023 = vpop.f32.mrf.mxu0
        %v2024 = vadd.f32 %v1932, %v2023
        %2025 = vmatmul.bf16.gmra.mxu0 %v335
        %v2026 = vpop.f32.mrf.mxu0
        %v2027 = vadd.f32 %v1935, %v2026
        %v2028 = vpop.f32.mrf.mxu0
        %v2029 = vadd.f32 %v1937, %v2028
        %2030 = vmatmul.bf16.gmra.mxu0 %v338
        %v2031 = vpop.f32.mrf.mxu0
        %v2032 = vadd.f32 %v1940, %v2031
        %v2033 = vpop.f32.mrf.mxu0
        %v2034 = vadd.f32 %v1942, %v2033
        %2035 = vmatmul.bf16.gmra.mxu0 %v341
        %v2036 = vpop.f32.mrf.mxu0
        %v2037 = vadd.f32 %v1945, %v2036
        %v2038 = vpop.f32.mrf.mxu0
        %v2039 = vadd.f32 %v1947, %v2038
        %2040 = vmatmul.bf16.gmra.mxu0 %v344
        %v2041 = vpop.f32.mrf.mxu0
        %v2042 = vadd.f32 %v1950, %v2041
        %v2043 = vpop.f32.mrf.mxu0
        %v2044 = vadd.f32 %v1952, %v2043
        %2045 = vmatmul.bf16.gmra.mxu0 %v347
        %v2046 = vpop.f32.mrf.mxu0
        %v2047 = vadd.f32 %v1955, %v2046
        %v2048 = vpop.f32.mrf.mxu0
        %v2049 = vadd.f32 %v1957, %v2048
        %2050 = vmatmul.bf16.gmra.mxu0 %v350
        %v2051 = vpop.f32.mrf.mxu0
        %v2052 = vadd.f32 %v1960, %v2051
        %v2053 = vpop.f32.mrf.mxu0
        %v2054 = vadd.f32 %v1962, %v2053
        %2055 = vmatmul.bf16.gmra.mxu0 %v353
        %v2056 = vpop.f32.mrf.mxu0
        %v2057 = vadd.f32 %v1965, %v2056
        %v2058 = vpop.f32.mrf.mxu0
        %v2059 = vadd.f32 %v1967, %v2058
        %2060 = vdwg.mxu0
        %s2061 = scalar_lea.vmem %s1, 14
        %v2062 = vld [vmem:[%s2061] sm:$0x3]
        %v2064 = vsel %vm355, %v2062, 0
        %2066 = vmatpush.bf16.msra.mxu0 0
        %2067 = vmatpush.bf16.msra.mxu0 0
        %2068 = vmatpush.bf16.msra.mxu0 0
        %2069 = vmatpush.bf16.msra.mxu0 0
        %2070 = vmatpush.bf16.msra.mxu0 0
        %2071 = vmatpush.bf16.msra.mxu0 0
        %2072 = vmatpush.bf16.msra.mxu0 0
        %2073 = vmatpush.bf16.msra.mxu0 %v2064
        %2074 = vmatmul.bf16.gmra.mxu0 %v1513
        %v2075 = vpop.f32.mrf.mxu0
        %v2076 = vadd.f32 0.0, %v2075
        %v2077 = vpop.f32.mrf.mxu0
        %v2078 = vadd.f32 0.0, %v2077
        %2079 = vmatmul.bf16.gmra.mxu0 %v1516
        %v2080 = vpop.f32.mrf.mxu0
        %v2081 = vadd.f32 0.0, %v2080
        %v2082 = vpop.f32.mrf.mxu0
        %v2083 = vadd.f32 0.0, %v2082
        %2084 = vmatmul.bf16.gmra.mxu0 %v1519
        %v2085 = vpop.f32.mrf.mxu0
        %v2086 = vadd.f32 0.0, %v2085
        %v2087 = vpop.f32.mrf.mxu0
        %v2088 = vadd.f32 0.0, %v2087
        %2089 = vmatmul.bf16.gmra.mxu0 %v1522
        %v2090 = vpop.f32.mrf.mxu0
        %v2091 = vadd.f32 0.0, %v2090
        %v2092 = vpop.f32.mrf.mxu0
        %v2093 = vadd.f32 0.0, %v2092
        %2094 = vmatmul.bf16.gmra.mxu0 %v1525
        %v2095 = vpop.f32.mrf.mxu0
        %v2096 = vadd.f32 0.0, %v2095
        %v2097 = vpop.f32.mrf.mxu0
        %v2098 = vadd.f32 0.0, %v2097
        %2099 = vmatmul.bf16.gmra.mxu0 %v1528
        %v2100 = vpop.f32.mrf.mxu0
        %v2101 = vadd.f32 0.0, %v2100
        %v2102 = vpop.f32.mrf.mxu0
        %v2103 = vadd.f32 0.0, %v2102
        %2104 = vmatmul.bf16.gmra.mxu0 %v1531
        %v2105 = vpop.f32.mrf.mxu0
        %v2106 = vadd.f32 0.0, %v2105
        %v2107 = vpop.f32.mrf.mxu0
        %v2108 = vadd.f32 0.0, %v2107
        %2109 = vmatmul.bf16.gmra.mxu0 %v1534
        %v2110 = vpop.f32.mrf.mxu0
        %v2111 = vadd.f32 0.0, %v2110
        %v2112 = vpop.f32.mrf.mxu0
        %v2113 = vadd.f32 0.0, %v2112
        %2114 = vmatmul.bf16.gmra.mxu0 %v1537
        %v2115 = vpop.f32.mrf.mxu0
        %v2116 = vadd.f32 0.0, %v2115
        %v2117 = vpop.f32.mrf.mxu0
        %v2118 = vadd.f32 0.0, %v2117
        %2119 = vmatmul.bf16.gmra.mxu0 %v1540
        %v2120 = vpop.f32.mrf.mxu0
        %v2121 = vadd.f32 0.0, %v2120
        %v2122 = vpop.f32.mrf.mxu0
        %v2123 = vadd.f32 0.0, %v2122
        %2124 = vmatmul.bf16.gmra.mxu0 %v1543
        %v2125 = vpop.f32.mrf.mxu0
        %v2126 = vadd.f32 0.0, %v2125
        %v2127 = vpop.f32.mrf.mxu0
        %v2128 = vadd.f32 0.0, %v2127
        %2129 = vmatmul.bf16.gmra.mxu0 %v1546
        %v2130 = vpop.f32.mrf.mxu0
        %v2131 = vadd.f32 0.0, %v2130
        %v2132 = vpop.f32.mrf.mxu0
        %v2133 = vadd.f32 0.0, %v2132
        %2134 = vmatmul.bf16.gmra.mxu0 %v1549
        %v2135 = vpop.f32.mrf.mxu0
        %v2136 = vadd.f32 0.0, %v2135
        %v2137 = vpop.f32.mrf.mxu0
        %v2138 = vadd.f32 0.0, %v2137
        %2139 = vmatmul.bf16.gmra.mxu0 %v1552
        %v2140 = vpop.f32.mrf.mxu0
        %v2141 = vadd.f32 0.0, %v2140
        %v2142 = vpop.f32.mrf.mxu0
        %v2143 = vadd.f32 0.0, %v2142
        %2144 = vmatmul.bf16.gmra.mxu0 %v1555
        %v2145 = vpop.f32.mrf.mxu0
        %v2146 = vadd.f32 0.0, %v2145
        %v2147 = vpop.f32.mrf.mxu0
        %v2148 = vadd.f32 0.0, %v2147
        %2149 = vmatmul.bf16.gmra.mxu0 %v1558
        %v2150 = vpop.f32.mrf.mxu0
        %v2151 = vadd.f32 0.0, %v2150
        %v2152 = vpop.f32.mrf.mxu0
        %v2153 = vadd.f32 0.0, %v2152
        %2154 = vdwg.mxu0
        %v2155 = vadd.f32 %v1982, %v2076
        %v2156 = vadd.f32 %v1984, %v2078
        %v2157 = vadd.f32 %v1987, %v2081
        %v2158 = vadd.f32 %v1989, %v2083
        %v2159 = vadd.f32 %v1992, %v2086
        %v2160 = vadd.f32 %v1994, %v2088
        %v2161 = vadd.f32 %v1997, %v2091
        %v2162 = vadd.f32 %v1999, %v2093
        %v2163 = vadd.f32 %v2002, %v2096
        %v2164 = vadd.f32 %v2004, %v2098
        %v2165 = vadd.f32 %v2007, %v2101
        %v2166 = vadd.f32 %v2009, %v2103
        %v2167 = vadd.f32 %v2012, %v2106
        %v2168 = vadd.f32 %v2014, %v2108
        %v2169 = vadd.f32 %v2017, %v2111
        %v2170 = vadd.f32 %v2019, %v2113
        %v2171 = vadd.f32 %v2022, %v2116
        %v2172 = vadd.f32 %v2024, %v2118
        %v2173 = vadd.f32 %v2027, %v2121
        %v2174 = vadd.f32 %v2029, %v2123
        %v2175 = vadd.f32 %v2032, %v2126
        %v2176 = vadd.f32 %v2034, %v2128
        %v2177 = vadd.f32 %v2037, %v2131
        %v2178 = vadd.f32 %v2039, %v2133
        %v2179 = vadd.f32 %v2042, %v2136
        %v2180 = vadd.f32 %v2044, %v2138
        %v2181 = vadd.f32 %v2047, %v2141
        %v2182 = vadd.f32 %v2049, %v2143
        %v2183 = vadd.f32 %v2052, %v2146
        %v2184 = vadd.f32 %v2054, %v2148
        %v2185 = vadd.f32 %v2057, %v2151
        %v2186 = vadd.f32 %v2059, %v2153
        %v2187 = vld [vmem:[%s1397] sm:$0xf]
        %v2188 = vld [vmem:[%s1397 + $0x4] sm:$0xf]
        %v2189 = vld [vmem:[%s1397 + $0x8] sm:$0x1]
        %v2190 = vld [vmem:[%s1397 + $0xc] sm:$0xf]
        %v2191 = vld [vmem:[%s1397 + $0x10] sm:$0xf]
        %v2192 = vld [vmem:[%s1397 + $0x14] sm:$0x1]
        %v2193 = vld [vmem:[%s1397 + $0x18] sm:$0xf]
        %v2194 = vld [vmem:[%s1397 + $0x1c] sm:$0xf]
        %v2195 = vld [vmem:[%s1397 + $0x20] sm:$0x1]
        %v2196 = vld [vmem:[%s1397 + $0x24] sm:$0xf]
        %v2197 = vld [vmem:[%s1397 + $0x28] sm:$0xf]
        %v2198 = vld [vmem:[%s1397 + $0x2c] sm:$0x1]
        %v2199 = vld [vmem:[%s1397 + $0x30] sm:$0xf]
        %v2200 = vld [vmem:[%s1397 + $0x34] sm:$0xf]
        %v2201 = vld [vmem:[%s1397 + $0x38] sm:$0x1]
        %v2202 = vld [vmem:[%s1397 + $0x3c] sm:$0xf]
        %v2203 = vld [vmem:[%s1397 + $0x40] sm:$0xf]
        %v2204 = vld [vmem:[%s1397 + $0x44] sm:$0x1]
        %v2205 = vld [vmem:[%s1397 + $0x48] sm:$0xf]
        %v2206 = vld [vmem:[%s1397 + $0x4c] sm:$0xf]
        %v2207 = vld [vmem:[%s1397 + $0x50] sm:$0x1]
        %v2208 = vld [vmem:[%s1397 + $0x54] sm:$0xf]
        %v2209 = vld [vmem:[%s1397 + $0x58] sm:$0xf]
        %v2210 = vld [vmem:[%s1397 + $0x5c] sm:$0x1]
        %v2211 = vld [vmem:[%s1397 + $0x60] sm:$0xf]
        %v2212 = vld [vmem:[%s1397 + $0x64] sm:$0xf]
        %v2213 = vld [vmem:[%s1397 + $0x68] sm:$0x1]
        %v2214 = vld [vmem:[%s1397 + $0x6c] sm:$0xf]
        %v2215 = vld [vmem:[%s1397 + $0x70] sm:$0xf]
        %v2216 = vld [vmem:[%s1397 + $0x74] sm:$0x1]
        %v2217 = vld [vmem:[%s1397 + $0x78] sm:$0xf]
        %v2218 = vld [vmem:[%s1397 + $0x7c] sm:$0xf]
        %v2219 = vld [vmem:[%s1397 + $0x80] sm:$0x1]
        %v2220 = vld [vmem:[%s1397 + $0x84] sm:$0xf]
        %v2221 = vld [vmem:[%s1397 + $0x88] sm:$0xf]
        %v2222 = vld [vmem:[%s1397 + $0x8c] sm:$0x1]
        %v2223 = vld [vmem:[%s1397 + $0x90] sm:$0xf]
        %v2224 = vld [vmem:[%s1397 + $0x94] sm:$0xf]
        %v2225 = vld [vmem:[%s1397 + $0x98] sm:$0x1]
        %v2226 = vld [vmem:[%s1397 + $0x9c] sm:$0xf]
        %v2227 = vld [vmem:[%s1397 + $0xa0] sm:$0xf]
        %v2228 = vld [vmem:[%s1397 + $0xa4] sm:$0x1]
        %v2229 = vld [vmem:[%s1397 + $0xa8] sm:$0xf]
        %v2230 = vld [vmem:[%s1397 + $0xac] sm:$0xf]
        %v2231 = vld [vmem:[%s1397 + $0xb0] sm:$0x1]
        %v2232 = vld [vmem:[%s1397 + $0xb4] sm:$0xf]
        %v2233 = vld [vmem:[%s1397 + $0xb8] sm:$0xf]
        %v2234 = vld [vmem:[%s1397 + $0xbc] sm:$0x1]
        %v2236 = vshrl.u32 %v2187, 16
        %v2238 = vrot.slane %v2236, 4
        %v2239 = vshll.u32 %v2187, 16
        %v2241 = vrot.slane %v2239, 5
        %v2242 = vor.u32 %v2238, %v2241
        %v2243 = vrot.slane %v2242, 4
        %v2245 = vshll.u32 %v2188, 16
        %v2247 = vrot.slane %v2245, 5
        %v2248 = vsel %vm596, %v2243, %v2247
        %v2249 = vshrl.u32 %v2188, 16
        %v2251 = vrot.slane %v2249, 4
        %v2252 = vor.u32 %v2251, %v2247
        %v2253 = vrot.slane %v2252, 4
        %v2255 = vshll.u32 %v2189, 16
        %v2257 = vrot.slane %v2255, 5
        %v2258 = vsel %vm596, %v2253, %v2257
        %v2260 = vshrl.u32 %v2190, 16
        %v2262 = vrot.slane %v2260, 4
        %v2263 = vshll.u32 %v2190, 16
        %v2265 = vrot.slane %v2263, 5
        %v2266 = vor.u32 %v2262, %v2265
        %v2267 = vrot.slane %v2266, 4
        %v2269 = vshll.u32 %v2191, 16
        %v2271 = vrot.slane %v2269, 5
        %v2272 = vsel %vm596, %v2267, %v2271
        %v2273 = vshrl.u32 %v2191, 16
        %v2275 = vrot.slane %v2273, 4
        %v2276 = vor.u32 %v2275, %v2271
        %v2277 = vrot.slane %v2276, 4
        %v2279 = vshll.u32 %v2192, 16
        %v2281 = vrot.slane %v2279, 5
        %v2282 = vsel %vm596, %v2277, %v2281
        %v2284 = vshrl.u32 %v2193, 16
        %v2286 = vrot.slane %v2284, 4
        %v2287 = vshll.u32 %v2193, 16
        %v2289 = vrot.slane %v2287, 5
        %v2290 = vor.u32 %v2286, %v2289
        %v2291 = vrot.slane %v2290, 4
        %v2293 = vshll.u32 %v2194, 16
        %v2295 = vrot.slane %v2293, 5
        %v2296 = vsel %vm596, %v2291, %v2295
        %v2297 = vshrl.u32 %v2194, 16
        %v2299 = vrot.slane %v2297, 4
        %v2300 = vor.u32 %v2299, %v2295
        %v2301 = vrot.slane %v2300, 4
        %v2303 = vshll.u32 %v2195, 16
        %v2305 = vrot.slane %v2303, 5
        %v2306 = vsel %vm596, %v2301, %v2305
        %v2308 = vshrl.u32 %v2196, 16
        %v2310 = vrot.slane %v2308, 4
        %v2311 = vshll.u32 %v2196, 16
        %v2313 = vrot.slane %v2311, 5
        %v2314 = vor.u32 %v2310, %v2313
        %v2315 = vrot.slane %v2314, 4
        %v2317 = vshll.u32 %v2197, 16
        %v2319 = vrot.slane %v2317, 5
        %v2320 = vsel %vm596, %v2315, %v2319
        %v2321 = vshrl.u32 %v2197, 16
        %v2323 = vrot.slane %v2321, 4
        %v2324 = vor.u32 %v2323, %v2319
        %v2325 = vrot.slane %v2324, 4
        %v2327 = vshll.u32 %v2198, 16
        %v2329 = vrot.slane %v2327, 5
        %v2330 = vsel %vm596, %v2325, %v2329
        %v2332 = vshrl.u32 %v2199, 16
        %v2334 = vrot.slane %v2332, 4
        %v2335 = vshll.u32 %v2199, 16
        %v2337 = vrot.slane %v2335, 5
        %v2338 = vor.u32 %v2334, %v2337
        %v2339 = vrot.slane %v2338, 4
        %v2341 = vshll.u32 %v2200, 16
        %v2343 = vrot.slane %v2341, 5
        %v2344 = vsel %vm596, %v2339, %v2343
        %v2345 = vshrl.u32 %v2200, 16
        %v2347 = vrot.slane %v2345, 4
        %v2348 = vor.u32 %v2347, %v2343
        %v2349 = vrot.slane %v2348, 4
        %v2351 = vshll.u32 %v2201, 16
        %v2353 = vrot.slane %v2351, 5
        %v2354 = vsel %vm596, %v2349, %v2353
        %v2356 = vshrl.u32 %v2202, 16
        %v2358 = vrot.slane %v2356, 4
        %v2359 = vshll.u32 %v2202, 16
        %v2361 = vrot.slane %v2359, 5
        %v2362 = vor.u32 %v2358, %v2361
        %v2363 = vrot.slane %v2362, 4
        %v2365 = vshll.u32 %v2203, 16
        %v2367 = vrot.slane %v2365, 5
        %v2368 = vsel %vm596, %v2363, %v2367
        %v2369 = vshrl.u32 %v2203, 16
        %v2371 = vrot.slane %v2369, 4
        %v2372 = vor.u32 %v2371, %v2367
        %v2373 = vrot.slane %v2372, 4
        %v2375 = vshll.u32 %v2204, 16
        %v2377 = vrot.slane %v2375, 5
        %v2378 = vsel %vm596, %v2373, %v2377
        %v2380 = vshrl.u32 %v2205, 16
        %v2382 = vrot.slane %v2380, 4
        %v2383 = vshll.u32 %v2205, 16
        %v2385 = vrot.slane %v2383, 5
        %v2386 = vor.u32 %v2382, %v2385
        %v2387 = vrot.slane %v2386, 4
        %v2389 = vshll.u32 %v2206, 16
        %v2391 = vrot.slane %v2389, 5
        %v2392 = vsel %vm596, %v2387, %v2391
        %v2393 = vshrl.u32 %v2206, 16
        %v2395 = vrot.slane %v2393, 4
        %v2396 = vor.u32 %v2395, %v2391
        %v2397 = vrot.slane %v2396, 4
        %v2399 = vshll.u32 %v2207, 16
        %v2401 = vrot.slane %v2399, 5
        %v2402 = vsel %vm596, %v2397, %v2401
        %v2404 = vshrl.u32 %v2208, 16
        %v2406 = vrot.slane %v2404, 4
        %v2407 = vshll.u32 %v2208, 16
        %v2409 = vrot.slane %v2407, 5
        %v2410 = vor.u32 %v2406, %v2409
        %v2411 = vrot.slane %v2410, 4
        %v2413 = vshll.u32 %v2209, 16
        %v2415 = vrot.slane %v2413, 5
        %v2416 = vsel %vm596, %v2411, %v2415
        %v2417 = vshrl.u32 %v2209, 16
        %v2419 = vrot.slane %v2417, 4
        %v2420 = vor.u32 %v2419, %v2415
        %v2421 = vrot.slane %v2420, 4
        %v2423 = vshll.u32 %v2210, 16
        %v2425 = vrot.slane %v2423, 5
        %v2426 = vsel %vm596, %v2421, %v2425
        %v2428 = vshrl.u32 %v2211, 16
        %v2430 = vrot.slane %v2428, 4
        %v2431 = vshll.u32 %v2211, 16
        %v2433 = vrot.slane %v2431, 5
        %v2434 = vor.u32 %v2430, %v2433
        %v2435 = vrot.slane %v2434, 4
        %v2437 = vshll.u32 %v2212, 16
        %v2439 = vrot.slane %v2437, 5
        %v2440 = vsel %vm596, %v2435, %v2439
        %v2441 = vshrl.u32 %v2212, 16
        %v2443 = vrot.slane %v2441, 4
        %v2444 = vor.u32 %v2443, %v2439
        %v2445 = vrot.slane %v2444, 4
        %v2447 = vshll.u32 %v2213, 16
        %v2449 = vrot.slane %v2447, 5
        %v2450 = vsel %vm596, %v2445, %v2449
        %v2452 = vshrl.u32 %v2214, 16
        %v2454 = vrot.slane %v2452, 4
        %v2455 = vshll.u32 %v2214, 16
        %v2457 = vrot.slane %v2455, 5
        %v2458 = vor.u32 %v2454, %v2457
        %v2459 = vrot.slane %v2458, 4
        %v2461 = vshll.u32 %v2215, 16
        %v2463 = vrot.slane %v2461, 5
        %v2464 = vsel %vm596, %v2459, %v2463
        %v2465 = vshrl.u32 %v2215, 16
        %v2467 = vrot.slane %v2465, 4
        %v2468 = vor.u32 %v2467, %v2463
        %v2469 = vrot.slane %v2468, 4
        %v2471 = vshll.u32 %v2216, 16
        %v2473 = vrot.slane %v2471, 5
        %v2474 = vsel %vm596, %v2469, %v2473
        %v2476 = vshrl.u32 %v2217, 16
        %v2478 = vrot.slane %v2476, 4
        %v2479 = vshll.u32 %v2217, 16
        %v2481 = vrot.slane %v2479, 5
        %v2482 = vor.u32 %v2478, %v2481
        %v2483 = vrot.slane %v2482, 4
        %v2485 = vshll.u32 %v2218, 16
        %v2487 = vrot.slane %v2485, 5
        %v2488 = vsel %vm596, %v2483, %v2487
        %v2489 = vshrl.u32 %v2218, 16
        %v2491 = vrot.slane %v2489, 4
        %v2492 = vor.u32 %v2491, %v2487
        %v2493 = vrot.slane %v2492, 4
        %v2495 = vshll.u32 %v2219, 16
        %v2497 = vrot.slane %v2495, 5
        %v2498 = vsel %vm596, %v2493, %v2497
        %v2500 = vshrl.u32 %v2220, 16
        %v2502 = vrot.slane %v2500, 4
        %v2503 = vshll.u32 %v2220, 16
        %v2505 = vrot.slane %v2503, 5
        %v2506 = vor.u32 %v2502, %v2505
        %v2507 = vrot.slane %v2506, 4
        %v2509 = vshll.u32 %v2221, 16
        %v2511 = vrot.slane %v2509, 5
        %v2512 = vsel %vm596, %v2507, %v2511
        %v2513 = vshrl.u32 %v2221, 16
        %v2515 = vrot.slane %v2513, 4
        %v2516 = vor.u32 %v2515, %v2511
        %v2517 = vrot.slane %v2516, 4
        %v2519 = vshll.u32 %v2222, 16
        %v2521 = vrot.slane %v2519, 5
        %v2522 = vsel %vm596, %v2517, %v2521
        %v2524 = vshrl.u32 %v2223, 16
        %v2526 = vrot.slane %v2524, 4
        %v2527 = vshll.u32 %v2223, 16
        %v2529 = vrot.slane %v2527, 5
        %v2530 = vor.u32 %v2526, %v2529
        %v2531 = vrot.slane %v2530, 4
        %v2533 = vshll.u32 %v2224, 16
        %v2535 = vrot.slane %v2533, 5
        %v2536 = vsel %vm596, %v2531, %v2535
        %v2537 = vshrl.u32 %v2224, 16
        %v2539 = vrot.slane %v2537, 4
        %v2540 = vor.u32 %v2539, %v2535
        %v2541 = vrot.slane %v2540, 4
        %v2543 = vshll.u32 %v2225, 16
        %v2545 = vrot.slane %v2543, 5
        %v2546 = vsel %vm596, %v2541, %v2545
        %v2548 = vshrl.u32 %v2226, 16
        %v2550 = vrot.slane %v2548, 4
        %v2551 = vshll.u32 %v2226, 16
        %v2553 = vrot.slane %v2551, 5
        %v2554 = vor.u32 %v2550, %v2553
        %v2555 = vrot.slane %v2554, 4
        %v2557 = vshll.u32 %v2227, 16
        %v2559 = vrot.slane %v2557, 5
        %v2560 = vsel %vm596, %v2555, %v2559
        %v2561 = vshrl.u32 %v2227, 16
        %v2563 = vrot.slane %v2561, 4
        %v2564 = vor.u32 %v2563, %v2559
        %v2565 = vrot.slane %v2564, 4
        %v2567 = vshll.u32 %v2228, 16
        %v2569 = vrot.slane %v2567, 5
        %v2570 = vsel %vm596, %v2565, %v2569
        %v2572 = vshrl.u32 %v2229, 16
        %v2574 = vrot.slane %v2572, 4
        %v2575 = vshll.u32 %v2229, 16
        %v2577 = vrot.slane %v2575, 5
        %v2578 = vor.u32 %v2574, %v2577
        %v2579 = vrot.slane %v2578, 4
        %v2581 = vshll.u32 %v2230, 16
        %v2583 = vrot.slane %v2581, 5
        %v2584 = vsel %vm596, %v2579, %v2583
        %v2585 = vshrl.u32 %v2230, 16
        %v2587 = vrot.slane %v2585, 4
        %v2588 = vor.u32 %v2587, %v2583
        %v2589 = vrot.slane %v2588, 4
        %v2591 = vshll.u32 %v2231, 16
        %v2593 = vrot.slane %v2591, 5
        %v2594 = vsel %vm596, %v2589, %v2593
        %v2596 = vshrl.u32 %v2232, 16
        %v2598 = vrot.slane %v2596, 4
        %v2599 = vshll.u32 %v2232, 16
        %v2601 = vrot.slane %v2599, 5
        %v2602 = vor.u32 %v2598, %v2601
        %v2603 = vrot.slane %v2602, 4
        %v2605 = vshll.u32 %v2233, 16
        %v2607 = vrot.slane %v2605, 5
        %v2608 = vsel %vm596, %v2603, %v2607
        %v2609 = vshrl.u32 %v2233, 16
        %v2611 = vrot.slane %v2609, 4
        %v2612 = vor.u32 %v2611, %v2607
        %v2613 = vrot.slane %v2612, 4
        %v2615 = vshll.u32 %v2234, 16
        %v2617 = vrot.slane %v2615, 5
        %v2618 = vsel %vm596, %v2613, %v2617
        %s2619 = scalar_lea.vmem %s1, 16
        %v2620 = vld [vmem:[%s2619] sm:$0x3]
        %v2621 = vunpack.c.l.b16 %v2248
        %v2622 = vunpack.c.l.b16 %v2258
        %v2623 = vunpack.c.l.b16 %v2272
        %v2624 = vunpack.c.l.b16 %v2282
        %v2625 = vunpack.c.l.b16 %v2296
        %v2626 = vunpack.c.l.b16 %v2306
        %v2627 = vunpack.c.l.b16 %v2320
        %v2628 = vunpack.c.l.b16 %v2330
        %v2629 = vunpack.c.l.b16 %v2344
        %v2630 = vunpack.c.l.b16 %v2354
        %v2631 = vunpack.c.l.b16 %v2368
        %v2632 = vunpack.c.l.b16 %v2378
        %v2633 = vunpack.c.l.b16 %v2392
        %v2634 = vunpack.c.l.b16 %v2402
        %v2635 = vunpack.c.l.b16 %v2416
        %v2636 = vunpack.c.l.b16 %v2426
        %v2637 = vunpack.c.l.b16 %v2440
        %v2638 = vunpack.c.l.b16 %v2450
        %v2639 = vunpack.c.l.b16 %v2464
        %v2640 = vunpack.c.l.b16 %v2474
        %v2641 = vunpack.c.l.b16 %v2488
        %v2642 = vunpack.c.l.b16 %v2498
        %v2643 = vunpack.c.l.b16 %v2512
        %v2644 = vunpack.c.l.b16 %v2522
        %v2645 = vunpack.c.l.b16 %v2536
        %v2646 = vunpack.c.l.b16 %v2546
        %v2647 = vunpack.c.l.b16 %v2560
        %v2648 = vunpack.c.l.b16 %v2570
        %v2649 = vunpack.c.l.b16 %v2584
        %v2650 = vunpack.c.l.b16 %v2594
        %v2651 = vunpack.c.l.b16 %v2608
        %v2652 = vunpack.c.l.b16 %v2618
        %v2653 = vpack.c.b16 %v2622, %v2621
        %v2654 = vpack.c.b16 %v2624, %v2623
        %v2655 = vpack.c.b16 %v2626, %v2625
        %v2656 = vpack.c.b16 %v2628, %v2627
        %v2657 = vpack.c.b16 %v2630, %v2629
        %v2658 = vpack.c.b16 %v2632, %v2631
        %v2659 = vpack.c.b16 %v2634, %v2633
        %v2660 = vpack.c.b16 %v2636, %v2635
        %v2661 = vpack.c.b16 %v2638, %v2637
        %v2662 = vpack.c.b16 %v2640, %v2639
        %v2663 = vpack.c.b16 %v2642, %v2641
        %v2664 = vpack.c.b16 %v2644, %v2643
        %v2665 = vpack.c.b16 %v2646, %v2645
        %v2666 = vpack.c.b16 %v2648, %v2647
        %v2667 = vpack.c.b16 %v2650, %v2649
        %v2668 = vpack.c.b16 %v2652, %v2651
        %v2670 = vsel %vm306, %v2653, 0
        %v2673 = vsel %vm306, %v2654, 0
        %v2676 = vsel %vm306, %v2655, 0
        %v2679 = vsel %vm306, %v2656, 0
        %v2682 = vsel %vm306, %v2657, 0
        %v2685 = vsel %vm306, %v2658, 0
        %v2688 = vsel %vm306, %v2659, 0
        %v2691 = vsel %vm306, %v2660, 0
        %v2694 = vsel %vm306, %v2661, 0
        %v2697 = vsel %vm306, %v2662, 0
        %v2700 = vsel %vm306, %v2663, 0
        %v2703 = vsel %vm306, %v2664, 0
        %v2706 = vsel %vm306, %v2665, 0
        %v2709 = vsel %vm306, %v2666, 0
        %v2712 = vsel %vm306, %v2667, 0
        %v2715 = vsel %vm306, %v2668, 0
        %v2718 = vsel %vm355, %v2620, 0
        %2720 = vmatpush.bf16.msra.mxu0 0
        %2721 = vmatpush.bf16.msra.mxu0 0
        %2722 = vmatpush.bf16.msra.mxu0 0
        %2723 = vmatpush.bf16.msra.mxu0 0
        %2724 = vmatpush.bf16.msra.mxu0 0
        %2725 = vmatpush.bf16.msra.mxu0 0
        %2726 = vmatpush.bf16.msra.mxu0 0
        %2727 = vmatpush.bf16.msra.mxu0 %v2718
        %2728 = vmatmul.bf16.gmra.mxu0 %v2670
        %v2729 = vpop.f32.mrf.mxu0
        %v2730 = vadd.f32 0.0, %v2729
        %v2731 = vpop.f32.mrf.mxu0
        %v2732 = vadd.f32 0.0, %v2731
        %2733 = vmatmul.bf16.gmra.mxu0 %v2673
        %v2734 = vpop.f32.mrf.mxu0
        %v2735 = vadd.f32 0.0, %v2734
        %v2736 = vpop.f32.mrf.mxu0
        %v2737 = vadd.f32 0.0, %v2736
        %2738 = vmatmul.bf16.gmra.mxu0 %v2676
        %v2739 = vpop.f32.mrf.mxu0
        %v2740 = vadd.f32 0.0, %v2739
        %v2741 = vpop.f32.mrf.mxu0
        %v2742 = vadd.f32 0.0, %v2741
        %2743 = vmatmul.bf16.gmra.mxu0 %v2679
        %v2744 = vpop.f32.mrf.mxu0
        %v2745 = vadd.f32 0.0, %v2744
        %v2746 = vpop.f32.mrf.mxu0
        %v2747 = vadd.f32 0.0, %v2746
        %2748 = vmatmul.bf16.gmra.mxu0 %v2682
        %v2749 = vpop.f32.mrf.mxu0
        %v2750 = vadd.f32 0.0, %v2749
        %v2751 = vpop.f32.mrf.mxu0
        %v2752 = vadd.f32 0.0, %v2751
        %2753 = vmatmul.bf16.gmra.mxu0 %v2685
        %v2754 = vpop.f32.mrf.mxu0
        %v2755 = vadd.f32 0.0, %v2754
        %v2756 = vpop.f32.mrf.mxu0
        %v2757 = vadd.f32 0.0, %v2756
        %2758 = vmatmul.bf16.gmra.mxu0 %v2688
        %v2759 = vpop.f32.mrf.mxu0
        %v2760 = vadd.f32 0.0, %v2759
        %v2761 = vpop.f32.mrf.mxu0
        %v2762 = vadd.f32 0.0, %v2761
        %2763 = vmatmul.bf16.gmra.mxu0 %v2691
        %v2764 = vpop.f32.mrf.mxu0
        %v2765 = vadd.f32 0.0, %v2764
        %v2766 = vpop.f32.mrf.mxu0
        %v2767 = vadd.f32 0.0, %v2766
        %2768 = vmatmul.bf16.gmra.mxu0 %v2694
        %v2769 = vpop.f32.mrf.mxu0
        %v2770 = vadd.f32 0.0, %v2769
        %v2771 = vpop.f32.mrf.mxu0
        %v2772 = vadd.f32 0.0, %v2771
        %2773 = vmatmul.bf16.gmra.mxu0 %v2697
        %v2774 = vpop.f32.mrf.mxu0
        %v2775 = vadd.f32 0.0, %v2774
        %v2776 = vpop.f32.mrf.mxu0
        %v2777 = vadd.f32 0.0, %v2776
        %2778 = vmatmul.bf16.gmra.mxu0 %v2700
        %v2779 = vpop.f32.mrf.mxu0
        %v2780 = vadd.f32 0.0, %v2779
        %v2781 = vpop.f32.mrf.mxu0
        %v2782 = vadd.f32 0.0, %v2781
        %2783 = vmatmul.bf16.gmra.mxu0 %v2703
        %v2784 = vpop.f32.mrf.mxu0
        %v2785 = vadd.f32 0.0, %v2784
        %v2786 = vpop.f32.mrf.mxu0
        %v2787 = vadd.f32 0.0, %v2786
        %2788 = vmatmul.bf16.gmra.mxu0 %v2706
        %v2789 = vpop.f32.mrf.mxu0
        %v2790 = vadd.f32 0.0, %v2789
        %v2791 = vpop.f32.mrf.mxu0
        %v2792 = vadd.f32 0.0, %v2791
        %2793 = vmatmul.bf16.gmra.mxu0 %v2709
        %v2794 = vpop.f32.mrf.mxu0
        %v2795 = vadd.f32 0.0, %v2794
        %v2796 = vpop.f32.mrf.mxu0
        %v2797 = vadd.f32 0.0, %v2796
        %2798 = vmatmul.bf16.gmra.mxu0 %v2712
        %v2799 = vpop.f32.mrf.mxu0
        %v2800 = vadd.f32 0.0, %v2799
        %v2801 = vpop.f32.mrf.mxu0
        %v2802 = vadd.f32 0.0, %v2801
        %2803 = vmatmul.bf16.gmra.mxu0 %v2715
        %v2804 = vpop.f32.mrf.mxu0
        %v2805 = vadd.f32 0.0, %v2804
        %v2806 = vpop.f32.mrf.mxu0
        %v2807 = vadd.f32 0.0, %v2806
        %2808 = vdwg.mxu0
        %v2809 = vadd.f32 %v2155, %v2730
        %v2810 = vadd.f32 %v2156, %v2732
        %v2811 = vadd.f32 %v2157, %v2735
        %v2812 = vadd.f32 %v2158, %v2737
        %v2813 = vadd.f32 %v2159, %v2740
        %v2814 = vadd.f32 %v2160, %v2742
        %v2815 = vadd.f32 %v2161, %v2745
        %v2816 = vadd.f32 %v2162, %v2747
        %v2817 = vadd.f32 %v2163, %v2750
        %v2818 = vadd.f32 %v2164, %v2752
        %v2819 = vadd.f32 %v2165, %v2755
        %v2820 = vadd.f32 %v2166, %v2757
        %v2821 = vadd.f32 %v2167, %v2760
        %v2822 = vadd.f32 %v2168, %v2762
        %v2823 = vadd.f32 %v2169, %v2765
        %v2824 = vadd.f32 %v2170, %v2767
        %v2825 = vadd.f32 %v2171, %v2770
        %v2826 = vadd.f32 %v2172, %v2772
        %v2827 = vadd.f32 %v2173, %v2775
        %v2828 = vadd.f32 %v2174, %v2777
        %v2829 = vadd.f32 %v2175, %v2780
        %v2830 = vadd.f32 %v2176, %v2782
        %v2831 = vadd.f32 %v2177, %v2785
        %v2832 = vadd.f32 %v2178, %v2787
        %v2833 = vadd.f32 %v2179, %v2790
        %v2834 = vadd.f32 %v2180, %v2792
        %v2835 = vadd.f32 %v2181, %v2795
        %v2836 = vadd.f32 %v2182, %v2797
        %v2837 = vadd.f32 %v2183, %v2800
        %v2838 = vadd.f32 %v2184, %v2802
        %v2839 = vadd.f32 %v2185, %v2805
        %v2840 = vadd.f32 %v2186, %v2807
        %v2841 = vadd.f32 %v2809, %v188
        %v2842 = vadd.f32 %v2810, %v188
        %v2843 = vadd.f32 %v2811, %v188
        %v2844 = vadd.f32 %v2812, %v188
        %v2845 = vadd.f32 %v2813, %v188
        %v2846 = vadd.f32 %v2814, %v188
        %v2847 = vadd.f32 %v2815, %v188
        %v2848 = vadd.f32 %v2816, %v188
        %v2849 = vadd.f32 %v2817, %v188
        %v2850 = vadd.f32 %v2818, %v188
        %v2851 = vadd.f32 %v2819, %v188
        %v2852 = vadd.f32 %v2820, %v188
        %v2853 = vadd.f32 %v2821, %v188
        %v2854 = vadd.f32 %v2822, %v188
        %v2855 = vadd.f32 %v2823, %v188
        %v2856 = vadd.f32 %v2824, %v188
        %v2857 = vadd.f32 %v2825, %v188
        %v2858 = vadd.f32 %v2826, %v188
        %v2859 = vadd.f32 %v2827, %v188
        %v2860 = vadd.f32 %v2828, %v188
        %v2861 = vadd.f32 %v2829, %v188
        %v2862 = vadd.f32 %v2830, %v188
        %v2863 = vadd.f32 %v2831, %v188
        %v2864 = vadd.f32 %v2832, %v188
        %v2865 = vadd.f32 %v2833, %v188
        %v2866 = vadd.f32 %v2834, %v188
        %v2867 = vadd.f32 %v2835, %v188
        %v2868 = vadd.f32 %v2836, %v188
        %v2869 = vadd.f32 %v2837, %v188
        %v2870 = vadd.f32 %v2838, %v188
        %v2871 = vadd.f32 %v2839, %v188
        %v2872 = vadd.f32 %v2840, %v188
        %v2873 = vmax.f32 %v2841, 0.0
        %v2874 = vmax.f32 %v2842, 0.0
        %v2875 = vmax.f32 %v2843, 0.0
        %v2876 = vmax.f32 %v2844, 0.0
        %v2877 = vmax.f32 %v2845, 0.0
        %v2878 = vmax.f32 %v2846, 0.0
        %v2879 = vmax.f32 %v2847, 0.0
        %v2880 = vmax.f32 %v2848, 0.0
        %v2881 = vmax.f32 %v2849, 0.0
        %v2882 = vmax.f32 %v2850, 0.0
        %v2883 = vmax.f32 %v2851, 0.0
        %v2884 = vmax.f32 %v2852, 0.0
        %v2885 = vmax.f32 %v2853, 0.0
        %v2886 = vmax.f32 %v2854, 0.0
        %v2887 = vmax.f32 %v2855, 0.0
        %v2888 = vmax.f32 %v2856, 0.0
        %v2889 = vmax.f32 %v2857, 0.0
        %v2890 = vmax.f32 %v2858, 0.0
        %v2891 = vmax.f32 %v2859, 0.0
        %v2892 = vmax.f32 %v2860, 0.0
        %v2893 = vmax.f32 %v2861, 0.0
        %v2894 = vmax.f32 %v2862, 0.0
        %v2895 = vmax.f32 %v2863, 0.0
        %v2896 = vmax.f32 %v2864, 0.0
        %v2897 = vmax.f32 %v2865, 0.0
        %v2898 = vmax.f32 %v2866, 0.0
        %v2899 = vmax.f32 %v2867, 0.0
        %v2900 = vmax.f32 %v2868, 0.0
        %v2901 = vmax.f32 %v2869, 0.0
        %v2902 = vmax.f32 %v2870, 0.0
        %v2903 = vmax.f32 %v2871, 0.0
        %v2904 = vmax.f32 %v2872, 0.0
        %v2905 = vpack.c.bf16 %v2873, %v2873
        %v2906 = vpack.c.bf16 %v2874, %v2874
        %v2907 = vpack.c.bf16 %v2875, %v2875
        %v2908 = vpack.c.bf16 %v2876, %v2876
        %v2909 = vpack.c.bf16 %v2877, %v2877
        %v2910 = vpack.c.bf16 %v2878, %v2878
        %v2911 = vpack.c.bf16 %v2879, %v2879
        %v2912 = vpack.c.bf16 %v2880, %v2880
        %v2913 = vpack.c.bf16 %v2881, %v2881
        %v2914 = vpack.c.bf16 %v2882, %v2882
        %v2915 = vpack.c.bf16 %v2883, %v2883
        %v2916 = vpack.c.bf16 %v2884, %v2884
        %v2917 = vpack.c.bf16 %v2885, %v2885
        %v2918 = vpack.c.bf16 %v2886, %v2886
        %v2919 = vpack.c.bf16 %v2887, %v2887
        %v2920 = vpack.c.bf16 %v2888, %v2888
        %v2921 = vpack.c.bf16 %v2889, %v2889
        %v2922 = vpack.c.bf16 %v2890, %v2890
        %v2923 = vpack.c.bf16 %v2891, %v2891
        %v2924 = vpack.c.bf16 %v2892, %v2892
        %v2925 = vpack.c.bf16 %v2893, %v2893
        %v2926 = vpack.c.bf16 %v2894, %v2894
        %v2927 = vpack.c.bf16 %v2895, %v2895
        %v2928 = vpack.c.bf16 %v2896, %v2896
        %v2929 = vpack.c.bf16 %v2897, %v2897
        %v2930 = vpack.c.bf16 %v2898, %v2898
        %v2931 = vpack.c.bf16 %v2899, %v2899
        %v2932 = vpack.c.bf16 %v2900, %v2900
        %v2933 = vpack.c.bf16 %v2901, %v2901
        %v2934 = vpack.c.bf16 %v2902, %v2902
        %v2935 = vpack.c.bf16 %v2903, %v2903
        %v2936 = vpack.c.bf16 %v2904, %v2904
        %s2937 = scalar_lea.vmem %s177, 384 [#allocation2]
        %2938 = vst [vmem:[%s2937] sm:$0xf] %v2905
        %2939 = vst [vmem:[%s2937 + $0x4] sm:$0xf] %v2906
        %2940 = vst [vmem:[%s2937 + $0x8] sm:$0xf] %v2907
        %2941 = vst [vmem:[%s2937 + $0xc] sm:$0xf] %v2908
        %2942 = vst [vmem:[%s2937 + $0x10] sm:$0xf] %v2909
        %2943 = vst [vmem:[%s2937 + $0x14] sm:$0xf] %v2910
        %2944 = vst [vmem:[%s2937 + $0x18] sm:$0xf] %v2911
        %2945 = vst [vmem:[%s2937 + $0x1c] sm:$0xf] %v2912
        %2946 = vst [vmem:[%s2937 + $0x20] sm:$0xf] %v2913
        %2947 = vst [vmem:[%s2937 + $0x24] sm:$0xf] %v2914
        %2948 = vst [vmem:[%s2937 + $0x28] sm:$0xf] %v2915
        %2949 = vst [vmem:[%s2937 + $0x2c] sm:$0xf] %v2916
        %2950 = vst [vmem:[%s2937 + $0x30] sm:$0xf] %v2917
        %2951 = vst [vmem:[%s2937 + $0x34] sm:$0xf] %v2918
        %2952 = vst [vmem:[%s2937 + $0x38] sm:$0xf] %v2919
        %2953 = vst [vmem:[%s2937 + $0x3c] sm:$0xf] %v2920
        %2954 = vst [vmem:[%s2937 + $0x40] sm:$0xf] %v2921
        %2955 = vst [vmem:[%s2937 + $0x44] sm:$0xf] %v2922
        %2956 = vst [vmem:[%s2937 + $0x48] sm:$0xf] %v2923
        %2957 = vst [vmem:[%s2937 + $0x4c] sm:$0xf] %v2924
        %2958 = vst [vmem:[%s2937 + $0x50] sm:$0xf] %v2925
        %2959 = vst [vmem:[%s2937 + $0x54] sm:$0xf] %v2926
        %2960 = vst [vmem:[%s2937 + $0x58] sm:$0xf] %v2927
        %2961 = vst [vmem:[%s2937 + $0x5c] sm:$0xf] %v2928
        %2962 = vst [vmem:[%s2937 + $0x60] sm:$0xf] %v2929
        %2963 = vst [vmem:[%s2937 + $0x64] sm:$0xf] %v2930
        %2964 = vst [vmem:[%s2937 + $0x68] sm:$0xf] %v2931
        %2965 = vst [vmem:[%s2937 + $0x6c] sm:$0xf] %v2932
        %2966 = vst [vmem:[%s2937 + $0x70] sm:$0xf] %v2933
        %2967 = vst [vmem:[%s2937 + $0x74] sm:$0xf] %v2934
        %2968 = vst [vmem:[%s2937 + $0x78] sm:$0xf] %v2935
        %2969 = vst [vmem:[%s2937 + $0x7c] sm:$0xf] %v2936
        %s2970 = sand.u32 %s107, 1
        %s2971 = scalar_lea.sflag [#allocation3], %s2970
        %s2972 = sand.u32 %s107, 1
        %s2973 = smul.addr %s2972, 512
        %s2974 = scalar_lea.vmem [#allocation2], %s2973
        // Predicated region
        $region33: #{tpu_custom_call.1} parent=31 // pred_check
          %p2975 = pneg %p117
        $region34: #{tpu_custom_call.1} parent=31 // pred_check_branch
          %2977 = sbr.rel (%p2975) target = $region36
        $region35: #{tpu_custom_call.1} parent=31 // pred_region
          %s2978 = smul.u32 32, %s22
          %2980 = vsyncadd %s2971, 0
          %s2981 = smul.addr %s21, 128
          %s2982 = sadd.s32 %s2978, %s2981
          %s2983 = smul.addr %s2982, 4
          %s2984 = scalar_lea.hbm %s3, %s2983
          %s2985 = sshll.u32 %s2974, 4
          %s2986 = int_to_ptr.vmem [resolvable:$true] %s2985
          %s2987 = sshll.u32 %s2984, 4
          %s2988 = int_to_ptr.hbm [resolvable:$true] %s2987
          %2993 = dma.vmem_to_hbm [thread:$0]  %s2986, 8192, %s2988, %s2971, 64, 64, 4
        $region36: #{tpu_custom_call.1} parent=31 // pred_fallthru
          _
      $region32: #{tpu_custom_call.1} parent=5 // pred_fallthru
        _
      %p2994 = scmp.le.s32.totalorder 2, %s12
      // Predicated region
      $region37: #{tpu_custom_call.1} parent=5 // pred_check
        %p2995 = pneg %p2994
      $region38: #{tpu_custom_call.1} parent=5 // pred_check_branch
        %2997 = sbr.rel (%p2995) target = $region40
      $region39: #{tpu_custom_call.1} parent=5 // pred_region
        %s2998 = ssub.s32 %s12, 2
        // Predicated region
        $region41: #{tpu_custom_call.1} parent=39 // pred_check
          %p2999 = pneg %p123
        $region42: #{tpu_custom_call.1} parent=39 // pred_check_branch
          %3001 = sbr.rel (%p2999) target = $region44
        $region43: #{tpu_custom_call.1} parent=39 // pred_region
          %s3002 = sand.u32 %s108, 1
          %s3003 = scalar_lea.sflag [#allocation3], %s3002
          %s3004 = sand.u32 %s108, 1
          %s3005 = smul.addr %s3004, 512
          %s3006 = scalar_lea.vmem [#allocation2], %s3005
          %3008 = dma.done %s3003, 8192
        $region44: #{tpu_custom_call.1} parent=39 // pred_fallthru
          _
      $region40: #{tpu_custom_call.1} parent=5 // pred_fallthru
        _
    $region6: #{tpu_custom_call.1} parent=1 // loop_footer
      %s16 = sadd.s32 1, %s12
    $region7: #{tpu_custom_call.1} parent=1 // loop_footer_branch
      %11 = sbr.rel target = $region3
    $region8: #{tpu_custom_call.1} parent=1 // loop_exit
      _
    %3009 = vsyncpa [#allocation3], 1
    %s3010 = scalar_lea.sflag [#allocation3], 1
    %3011 = vsyncpa %s3010, 1

</llo_original>
